<compile_context>
chip_gen: v7x
topology: tpu7x:2x2x1
jax: 0.10.0
libtpu: 0.0.40
codegen_flags: <defaults>
</compile_context>

<pallas_src>
import functools

import jax
import jax.numpy as jnp
from jax import lax
from jax.experimental import pallas as pl
from jax.experimental.pallas import tpu as pltpu

THRESH = 1e-6  # nn.Threshold(1e-06, 0)


# ----------------------------------------------------------------------------
# Fused kernel: feature projections (per time chunk) + serial GRU recurrence
# + mean over time + final Linear.
# ----------------------------------------------------------------------------
def fused_text_encoder_kernel(
        x_ref, w1_ref, b1_ref, w2_ref, b2_ref, wih_ref, bih_ref,
        whh_ref, bhh_ref, wl_ref, bl_ref,
        o_ref,
        h_scr, acc_scr, gx_scr,
        *, t_chunk, seq_len, bp, hidden):
    c = pl.program_id(0)
    C = hidden
    G = 3 * C

    @pl.when(c == 0)
    def _():
        h_scr[...] = jnp.zeros_like(h_scr)
        acc_scr[...] = jnp.zeros_like(acc_scr)

    # ---- position-independent projections for the whole chunk (TC*BP rows) ----
    x = x_ref[...]                                                       # (TC*BP, V) bf16
    h1 = jnp.dot(x, w1_ref[...], preferred_element_type=jnp.float32) + b1_ref[...]
    h1 = jnp.where(h1 > THRESH, h1, 0.0)                                 # f32
    h2 = jnp.dot(h1.astype(jnp.bfloat16), w2_ref[...],
                 preferred_element_type=jnp.float32) + b2_ref[...]
    h2 = jnp.where(h2 > THRESH, h2, 0.0)                                 # f32
    gx_scr[...] = jnp.dot(h2.astype(jnp.bfloat16), wih_ref[...],
                          preferred_element_type=jnp.float32) + bih_ref[...]

    # ---- serial recurrence over the TC timesteps of this chunk ----
    whh = whh_ref[...]                                                   # (C, 3C) bf16
    # Hoist the (1,3C)->(BP,3C) broadcast out of the unrolled loop (no CSE in JAX).
    bhh_b = jnp.broadcast_to(bhh_ref[...], (bp, G))                      # f32

    def step(j, carry):
        h, acc = carry                                                   # f32 carries
        row = pl.multiple_of(j * bp, bp)
        gx = gx_scr[pl.ds(row, bp), :]                                   # (BP, 3C) f32
        gh = jnp.dot(h.astype(jnp.bfloat16), whh,
                     preferred_element_type=jnp.float32) + bhh_b         # (BP, 3C) f32
        # PyTorch GRU gate order: r, z, n  (C = 128 -> lane-aligned slices)
        r = jax.nn.sigmoid(gx[:, 0 * C:1 * C] + gh[:, 0 * C:1 * C])
        z = jax.nn.sigmoid(gx[:, 1 * C:2 * C] + gh[:, 1 * C:2 * C])
        n = jnp.tanh(gx[:, 2 * C:3 * C] + r * gh[:, 2 * C:3 * C])
        h_new = (1.0 - z) * n + z * h
        # Mask out padded timesteps (seq padded up to a multiple of t_chunk).
        valid = (c * t_chunk + j) < seq_len
        h_out = jnp.where(valid, h_new, h)
        acc_out = acc + jnp.where(valid, h_new, 0.0)
        return h_out, acc_out

    h_fin, acc_fin = lax.fori_loop(
        0, t_chunk, step, (h_scr[...], acc_scr[...]),
        unroll=True if t_chunk <= 16 else 8)
    h_scr[...] = h_fin
    acc_scr[...] = acc_fin

    @pl.when(c == pl.num_programs(0) - 1)
    def _():
        mean_h = acc_scr[...] * (1.0 / seq_len)                          # mean over time
        # dropout p=0.0 (module default / eval) -> identity
        # TODO(synk): dropout with p>0 (training mode) not implemented in-kernel.
        out = jnp.dot(mean_h.astype(jnp.bfloat16), wl_ref[...],
                      preferred_element_type=jnp.float32) + bl_ref[...]  # (BP, FP)
        o_ref[...] = out.astype(o_ref.dtype)


# ----------------------------------------------------------------------------
# Wrapper
# ----------------------------------------------------------------------------
def text_encoder_forward(x_bsv, params, *, t_chunk=32):
    (W1, b1, W2, b2, Wih, Whh, bih, bhh, Wl, bl) = params
    B, S, V = x_bsv.shape
    MID = W1.shape[0]
    C = Whh.shape[1]
    F = Wl.shape[0]
    G = 3 * C

    BP = max(8, ((B + 7) // 8) * 8)           # batch padded to 8 sublanes
    FP = max(128, ((F + 127) // 128) * 128)   # output feature padded to 128 lanes

    TC = max(1, min(t_chunk, S))              # timesteps per serial grid step
    if (TC * BP) % 16 != 0:                   # keep bf16 x-block sublanes tile-friendly
        TC += 1
    S_pad = pl.cdiv(S, TC) * TC               # pad seq up-front: no inter-phase repad
    n_chunks = S_pad // TC

    # Cast to bf16 FIRST (halves HBM traffic of the transpose/pad ops), then
    # sequence-major, batch/time-padded rows: (S_pad, BP, V) -> (S_pad*BP, V).
    x_sbv = jnp.transpose(x_bsv.astype(jnp.bfloat16), (1, 0, 2))         # (S, B, V)
    x_sbv = jnp.pad(x_sbv, ((0, S_pad - S), (0, BP - B), (0, 0)))
    x_rows = x_sbv.reshape(S_pad * BP, V)

    # Pre-transposed bf16 matmul weights (MXU-native on v5e/v6e/v7x); f32 biases.
    W1T = W1.T.astype(jnp.bfloat16)           # (V, MID)
    W2T = W2.T.astype(jnp.bfloat16)           # (MID, C)
    WihT = Wih.T.astype(jnp.bfloat16)         # (C, 3C)
    WhhT = Whh.T.astype(jnp.bfloat16)         # (C, 3C)  -- recurrence critical path
    WlT = Wl.T.astype(jnp.bfloat16)           # (C, F)
    b1r = b1.reshape(1, MID).astype(jnp.float32)
    b2r = b2.reshape(1, C).astype(jnp.float32)
    bihr = bih.reshape(1, G).astype(jnp.float32)
    bhhr = bhh.reshape(1, G).astype(jnp.float32)
    blr = bl.reshape(1, F).astype(jnp.float32)
    if FP != F:
        WlT = jnp.pad(WlT, ((0, 0), (0, FP - F)))
        blr = jnp.pad(blr, ((0, 0), (0, FP - F)))

    kernel = functools.partial(fused_text_encoder_kernel,
                               t_chunk=TC, seq_len=S, bp=BP, hidden=C)

    out_pad = pl.pallas_call(
        kernel,
        out_shape=jax.ShapeDtypeStruct((BP, FP), jnp.float32),
        grid_spec=pltpu.PrefetchScalarGridSpec(
            num_scalar_prefetch=0,
            grid=(n_chunks,),
            in_specs=[
                pl.BlockSpec((TC * BP, V), lambda c: (c, 0)),   # x rows for this chunk
                pl.BlockSpec((V, MID), lambda c: (0, 0)),       # conv1 W^T
                pl.BlockSpec((1, MID), lambda c: (0, 0)),       # conv1 b
                pl.BlockSpec((MID, C), lambda c: (0, 0)),       # conv2 W^T
                pl.BlockSpec((1, C), lambda c: (0, 0)),         # conv2 b
                pl.BlockSpec((C, G), lambda c: (0, 0)),         # GRU W_ih^T
                pl.BlockSpec((1, G), lambda c: (0, 0)),         # GRU b_ih
                pl.BlockSpec((C, G), lambda c: (0, 0)),         # GRU W_hh^T
                pl.BlockSpec((1, G), lambda c: (0, 0)),         # GRU b_hh
                pl.BlockSpec((C, FP), lambda c: (0, 0)),        # linear W^T (lane-padded)
                pl.BlockSpec((1, FP), lambda c: (0, 0)),        # linear b (lane-padded)
            ],
            out_specs=pl.BlockSpec((BP, FP), lambda c: (0, 0)),
            scratch_shapes=[
                pltpu.VMEM((BP, C), jnp.float32),        # GRU hidden state
                pltpu.VMEM((BP, C), jnp.float32),        # running sum for mean over time
                pltpu.VMEM((TC * BP, G), jnp.float32),   # gx for this chunk (never hits HBM)
            ],
        ),
        compiler_params=pltpu.CompilerParams(
            dimension_semantics=("arbitrary",)),         # serial recurrence over time
    )(x_rows, W1T, b1r, W2T, b2r, WihT, bihr, WhhT, bhhr, WlT, blr)

    return out_pad[:B, :F]


# ----------------------------------------------------------------------------
# Pure-JAX reference (eval mode / p=0 dropout), all f32.
# ----------------------------------------------------------------------------
def text_encoder_reference(x_bsv, params):
    (W1, b1, W2, b2, Wih, Whh, bih, bhh, Wl, bl) = params
    B, S, V = x_bsv.shape
    C = Whh.shape[1]

    h1 = x_bsv @ W1.T + b1
    h1 = jnp.where(h1 > THRESH, h1, 0.0)
    h2 = h1 @ W2.T + b2
    h2 = jnp.where(h2 > THRESH, h2, 0.0)                    # (B, S, C)
    h2 = jnp.transpose(h2, (1, 0, 2))                       # (S, B, C)

    def step(h, x_t):
        gx = x_t @ Wih.T + bih
        gh = h @ Whh.T + bhh
        r = jax.nn.sigmoid(gx[:, :C] + gh[:, :C])
        z = jax.nn.sigmoid(gx[:, C:2 * C] + gh[:, C:2 * C])
        n = jnp.tanh(gx[:, 2 * C:] + r * gh[:, 2 * C:])
        h_new = (1.0 - z) * n + z * h
        return h_new, h_new

    h0 = jnp.zeros((B, C), jnp.float32)
    _, hs = lax.scan(step, h0, h2)
    mean_h = hs.mean(axis=0)
    return mean_h @ Wl.T + bl


if __name__ == "__main__":
    # Small shapes consistent with the module: d_vocab=32, 256 fixed mid channels,
    # d_text_enc_cnn=128, d_text_feature=64, batch=2, seq=8.
    B, S, V, MID, C, F = 2, 8, 32, 256, 128, 64

    key = jax.random.PRNGKey(0)
    ks = jax.random.split(key, 11)
    x = jax.random.normal(ks[0], (B, S, V), jnp.float32)

    params = (
        jax.random.normal(ks[1], (MID, V), jnp.float32) * 0.1,      # conv1.weight (squeezed)
        jax.random.normal(ks[2], (1, MID), jnp.float32) * 0.1,      # conv1.bias
        jax.random.normal(ks[3], (C, MID), jnp.float32) * 0.05,     # conv2.weight
        jax.random.normal(ks[4], (1, C), jnp.float32) * 0.1,        # conv2.bias
        jax.random.normal(ks[5], (3 * C, C), jnp.float32) * 0.05,   # gru.weight_ih_l0
        jax.random.normal(ks[6], (3 * C, C), jnp.float32) * 0.05,   # gru.weight_hh_l0
        jax.random.normal(ks[7], (1, 3 * C), jnp.float32) * 0.1,    # gru.bias_ih_l0
        jax.random.normal(ks[8], (1, 3 * C), jnp.float32) * 0.1,    # gru.bias_hh_l0
        jax.random.normal(ks[9], (F, C), jnp.float32) * 0.05,       # linear.weight
        jax.random.normal(ks[10], (1, F), jnp.float32) * 0.1,       # linear.bias
    )

    out = jax.block_until_ready(text_encoder_forward(x, params))
    ref = jax.block_until_ready(text_encoder_reference(x, params))

    assert out.shape == (B, F), out.shape
    # bf16 MXU inputs (f32 accumulation / f32 carries & gate math) -> loose tolerance.
    assert jnp.allclose(out, ref, atol=2e-2, rtol=2e-2), (
        float(jnp.max(jnp.abs(out - ref))))
    print("KERNEL_OK")
</pallas_src>

<mosaic_0001>
module attributes {stable_mosaic.version = 11 : i64} {
  func.func @fused_text_encoder_kernel(%arg0: i32, %arg1: memref<64x32xbf16, #tpu.memory_space<vmem>>, %arg2: memref<32x256xbf16, #tpu.memory_space<vmem>>, %arg3: memref<1x256xf32, #tpu.memory_space<vmem>>, %arg4: memref<256x128xbf16, #tpu.memory_space<vmem>>, %arg5: memref<1x128xf32, #tpu.memory_space<vmem>>, %arg6: memref<128x384xbf16, #tpu.memory_space<vmem>>, %arg7: memref<1x384xf32, #tpu.memory_space<vmem>>, %arg8: memref<128x384xbf16, #tpu.memory_space<vmem>>, %arg9: memref<1x384xf32, #tpu.memory_space<vmem>>, %arg10: memref<128x128xbf16, #tpu.memory_space<vmem>>, %arg11: memref<1x128xf32, #tpu.memory_space<vmem>>, %arg12: memref<8x128xf32, #tpu.memory_space<vmem>>, %arg13: memref<8x128xf32, #tpu.memory_space<vmem>>, %arg14: memref<8x128xf32, #tpu.memory_space<vmem>>, %arg15: memref<64x384xf32, #tpu.memory_space<vmem>>) attributes {dimension_semantics = [#tpu.dimension_semantics<arbitrary>], iteration_bounds = array<i64: 1>, scalar_prefetch = 0 : i64, scratch_operands = 3 : i64, tpu.core_type = #tpu.core_type<tc>, window_params = [{transform_indices = @transform_0, window_bounds = array<i64: 64, 32>}, {pipeline_mode = #tpu.pipeline_mode<synchronous>, transform_indices = @transform_1, window_bounds = array<i64: 32, 256>}, {pipeline_mode = #tpu.pipeline_mode<synchronous>, transform_indices = @transform_2, window_bounds = array<i64: 1, 256>}, {pipeline_mode = #tpu.pipeline_mode<synchronous>, transform_indices = @transform_3, window_bounds = array<i64: 256, 128>}, {pipeline_mode = #tpu.pipeline_mode<synchronous>, transform_indices = @transform_4, window_bounds = array<i64: 1, 128>}, {pipeline_mode = #tpu.pipeline_mode<synchronous>, transform_indices = @transform_5, window_bounds = array<i64: 128, 384>}, {pipeline_mode = #tpu.pipeline_mode<synchronous>, transform_indices = @transform_6, window_bounds = array<i64: 1, 384>}, {pipeline_mode = #tpu.pipeline_mode<synchronous>, transform_indices = @transform_7, window_bounds = array<i64: 128, 384>}, {pipeline_mode = #tpu.pipeline_mode<synchronous>, transform_indices = @transform_8, window_bounds = array<i64: 1, 384>}, {pipeline_mode = #tpu.pipeline_mode<synchronous>, transform_indices = @transform_9, window_bounds = array<i64: 128, 128>}, {pipeline_mode = #tpu.pipeline_mode<synchronous>, transform_indices = @transform_10, window_bounds = array<i64: 1, 128>}, {pipeline_mode = #tpu.pipeline_mode<synchronous>, transform_indices = @transform_11, window_bounds = array<i64: 8, 128>}]} {
    %c0_i32 = arith.constant 0 : i32
    %0 = arith.cmpi eq, %arg0, %c0_i32 : i32
    %1 = arith.extui %0 : i1 to i32
    %c0_i32_0 = arith.constant 0 : i32
    %2 = arith.cmpi ne, %1, %c0_i32_0 : i32
    scf.if %2 {
      %cst_109 = arith.constant 0.000000e+00 : f32
      %361 = vector.broadcast %cst_109 : f32 to vector<8x128xf32>
      %c0_110 = arith.constant 0 : index
      %c0_111 = arith.constant 0 : index
      %362 = vector.load %arg13[%c0_110, %c0_111] : memref<8x128xf32, #tpu.memory_space<vmem>>, vector<8x128xf32>
      tpu.vector_store %arg13[%c0_110, %c0_111], %361 {strides = array<i32>} : memref<8x128xf32, #tpu.memory_space<vmem>>, vector<8x128xf32>,
      %cst_112 = arith.constant 0.000000e+00 : f32
      %363 = vector.broadcast %cst_112 : f32 to vector<8x128xf32>
      %c0_113 = arith.constant 0 : index
      %c0_114 = arith.constant 0 : index
      %364 = vector.load %arg14[%c0_113, %c0_114] : memref<8x128xf32, #tpu.memory_space<vmem>>, vector<8x128xf32>
      tpu.vector_store %arg14[%c0_113, %c0_114], %363 {strides = array<i32>} : memref<8x128xf32, #tpu.memory_space<vmem>>, vector<8x128xf32>,
    } else {
    }
    %c0 = arith.constant 0 : index
    %c0_1 = arith.constant 0 : index
    %3 = vector.load %arg1[%c0, %c0_1] : memref<64x32xbf16, #tpu.memory_space<vmem>>, vector<64x32xbf16>
    %c0_2 = arith.constant 0 : index
    %c0_3 = arith.constant 0 : index
    %4 = vector.load %arg2[%c0_2, %c0_3] : memref<32x256xbf16, #tpu.memory_space<vmem>>, vector<32x256xbf16>
    %cst = arith.constant dense<0.000000e+00> : vector<64x256xf32>
    %5 = tpu.matmul %3, %4, %cst {dimension_numbers = #tpu.dot_dimension_numbers<[1], [0], [0], [1], [0, 0, 1, 1], [], []>} : vector<64x32xbf16>, vector<32x256xbf16>, vector<64x256xf32> -> vector<64x256xf32>
    %c0_4 = arith.constant 0 : index
    %c0_5 = arith.constant 0 : index
    %6 = vector.load %arg3[%c0_4, %c0_5] : memref<1x256xf32, #tpu.memory_space<vmem>>, vector<1x256xf32>
    %7 = vector.broadcast %6 : vector<1x256xf32> to vector<64x256xf32>
    %8 = arith.addf %5, %7 : vector<64x256xf32>
    %cst_6 = arith.constant 9.99999997E-7 : f32
    %9 = vector.broadcast %cst_6 : f32 to vector<64x256xf32>
    %10 = arith.cmpf ogt, %8, %9 : vector<64x256xf32>
    %cst_7 = arith.constant 0.000000e+00 : f32
    %11 = vector.broadcast %cst_7 : f32 to vector<64x256xf32>
    %12 = arith.select %10, %8, %11 : vector<64x256xi1>, vector<64x256xf32>
    %13 = arith.truncf %12 : vector<64x256xf32> to vector<64x256xbf16>
    %c0_8 = arith.constant 0 : index
    %c0_9 = arith.constant 0 : index
    %14 = vector.load %arg4[%c0_8, %c0_9] : memref<256x128xbf16, #tpu.memory_space<vmem>>, vector<256x128xbf16>
    %cst_10 = arith.constant dense<0.000000e+00> : vector<64x128xf32>
    %15 = tpu.matmul %13, %14, %cst_10 {dimension_numbers = #tpu.dot_dimension_numbers<[1], [0], [0], [1], [0, 0, 1, 1], [], []>} : vector<64x256xbf16>, vector<256x128xbf16>, vector<64x128xf32> -> vector<64x128xf32>
    %c0_11 = arith.constant 0 : index
    %c0_12 = arith.constant 0 : index
    %16 = vector.load %arg5[%c0_11, %c0_12] : memref<1x128xf32, #tpu.memory_space<vmem>>, vector<1x128xf32>
    %17 = vector.broadcast %16 : vector<1x128xf32> to vector<64x128xf32>
    %18 = arith.addf %15, %17 : vector<64x128xf32>
    %cst_13 = arith.constant 9.99999997E-7 : f32
    %19 = vector.broadcast %cst_13 : f32 to vector<64x128xf32>
    %20 = arith.cmpf ogt, %18, %19 : vector<64x128xf32>
    %cst_14 = arith.constant 0.000000e+00 : f32
    %21 = vector.broadcast %cst_14 : f32 to vector<64x128xf32>
    %22 = arith.select %20, %18, %21 : vector<64x128xi1>, vector<64x128xf32>
    %23 = arith.truncf %22 : vector<64x128xf32> to vector<64x128xbf16>
    %c0_15 = arith.constant 0 : index
    %c0_16 = arith.constant 0 : index
    %24 = vector.load %arg6[%c0_15, %c0_16] : memref<128x384xbf16, #tpu.memory_space<vmem>>, vector<128x384xbf16>
    %cst_17 = arith.constant dense<0.000000e+00> : vector<64x384xf32>
    %25 = tpu.matmul %23, %24, %cst_17 {dimension_numbers = #tpu.dot_dimension_numbers<[1], [0], [0], [1], [0, 0, 1, 1], [], []>} : vector<64x128xbf16>, vector<128x384xbf16>, vector<64x384xf32> -> vector<64x384xf32>
    %c0_18 = arith.constant 0 : index
    %c0_19 = arith.constant 0 : index
    %26 = vector.load %arg7[%c0_18, %c0_19] : memref<1x384xf32, #tpu.memory_space<vmem>>, vector<1x384xf32>
    %27 = vector.broadcast %26 : vector<1x384xf32> to vector<64x384xf32>
    %28 = arith.addf %25, %27 : vector<64x384xf32>
    %c0_20 = arith.constant 0 : index
    %c0_21 = arith.constant 0 : index
    %29 = vector.load %arg15[%c0_20, %c0_21] : memref<64x384xf32, #tpu.memory_space<vmem>>, vector<64x384xf32>
    tpu.vector_store %arg15[%c0_20, %c0_21], %28 {strides = array<i32>} : memref<64x384xf32, #tpu.memory_space<vmem>>, vector<64x384xf32>,
    %c0_22 = arith.constant 0 : index
    %c0_23 = arith.constant 0 : index
    %30 = vector.load %arg8[%c0_22, %c0_23] : memref<128x384xbf16, #tpu.memory_space<vmem>>, vector<128x384xbf16>
    %c0_24 = arith.constant 0 : index
    %c0_25 = arith.constant 0 : index
    %31 = vector.load %arg9[%c0_24, %c0_25] : memref<1x384xf32, #tpu.memory_space<vmem>>, vector<1x384xf32>
    %32 = vector.shape_cast %31 : vector<1x384xf32> to vector<1x384xf32>
    %33 = vector.broadcast %32 : vector<1x384xf32> to vector<8x384xf32>
    %c0_26 = arith.constant 0 : index
    %c0_27 = arith.constant 0 : index
    %34 = vector.load %arg13[%c0_26, %c0_27] : memref<8x128xf32, #tpu.memory_space<vmem>>, vector<8x128xf32>
    %c0_28 = arith.constant 0 : index
    %c0_29 = arith.constant 0 : index
    %35 = vector.load %arg14[%c0_28, %c0_29] : memref<8x128xf32, #tpu.memory_space<vmem>>, vector<8x128xf32>
    %c0_i32_30 = arith.constant 0 : i32
    %c8_i32 = arith.constant 8 : i32
    %36 = arith.muli %c0_i32_30, %c8_i32 : i32
    %37 = tpu.assume_multiple %36, 8 : i32
    %38 = arith.index_cast %37 : i32 to index
    %c0_31 = arith.constant 0 : index
    %39 = vector.load %arg15[%38, %c0_31] : memref<64x384xf32, #tpu.memory_space<vmem>>, vector<8x384xf32>
    %40 = arith.truncf %34 : vector<8x128xf32> to vector<8x128xbf16>
    %cst_32 = arith.constant dense<0.000000e+00> : vector<8x384xf32>
    %41 = tpu.matmul %40, %30, %cst_32 {dimension_numbers = #tpu.dot_dimension_numbers<[1], [0], [0], [1], [0, 0, 1, 1], [], []>} : vector<8x128xbf16>, vector<128x384xbf16>, vector<8x384xf32> -> vector<8x384xf32>
    %42 = arith.addf %41, %33 : vector<8x384xf32>
    %43 = vector.extract_strided_slice %39 {offsets = [0, 0], sizes = [8, 128], strides = [1, 1]} : vector<8x384xf32> to vector<8x128xf32>
    %44 = vector.extract_strided_slice %42 {offsets = [0, 0], sizes = [8, 128], strides = [1, 1]} : vector<8x384xf32> to vector<8x128xf32>
    %45 = arith.addf %43, %44 : vector<8x128xf32>
    %46 = arith.negf %45 : vector<8x128xf32>
    %47 = math.exp %46 : vector<8x128xf32>
    %cst_33 = arith.constant 1.000000e+00 : f32
    %48 = vector.broadcast %cst_33 : f32 to vector<8x128xf32>
    %49 = arith.addf %48, %47 : vector<8x128xf32>
    %50 = arith.divf %48, %49 : vector<8x128xf32>
    %51 = vector.extract_strided_slice %39 {offsets = [0, 128], sizes = [8, 128], strides = [1, 1]} : vector<8x384xf32> to vector<8x128xf32>
    %52 = vector.extract_strided_slice %42 {offsets = [0, 128], sizes = [8, 128], strides = [1, 1]} : vector<8x384xf32> to vector<8x128xf32>
    %53 = arith.addf %51, %52 : vector<8x128xf32>
    %54 = arith.negf %53 : vector<8x128xf32>
    %55 = math.exp %54 : vector<8x128xf32>
    %cst_34 = arith.constant 1.000000e+00 : f32
    %56 = vector.broadcast %cst_34 : f32 to vector<8x128xf32>
    %57 = arith.addf %56, %55 : vector<8x128xf32>
    %58 = arith.divf %56, %57 : vector<8x128xf32>
    %59 = vector.extract_strided_slice %39 {offsets = [0, 256], sizes = [8, 128], strides = [1, 1]} : vector<8x384xf32> to vector<8x128xf32>
    %60 = vector.extract_strided_slice %42 {offsets = [0, 256], sizes = [8, 128], strides = [1, 1]} : vector<8x384xf32> to vector<8x128xf32>
    %61 = arith.mulf %50, %60 : vector<8x128xf32>
    %62 = arith.addf %59, %61 : vector<8x128xf32>
    %63 = math.tanh %62 : vector<8x128xf32>
    %cst_35 = arith.constant 1.000000e+00 : f32
    %64 = vector.broadcast %cst_35 : f32 to vector<8x128xf32>
    %65 = arith.subf %64, %58 : vector<8x128xf32>
    %66 = arith.mulf %65, %63 : vector<8x128xf32>
    %67 = arith.mulf %58, %34 : vector<8x128xf32>
    %68 = arith.addf %66, %67 : vector<8x128xf32>
    %c8_i32_36 = arith.constant 8 : i32
    %69 = arith.muli %arg0, %c8_i32_36 : i32
    %70 = arith.addi %69, %c0_i32_30 : i32
    %c8_i32_37 = arith.constant 8 : i32
    %71 = arith.cmpi slt, %70, %c8_i32_37 : i32
    %72 = arith.select %71, %68, %34 : vector<8x128xf32>
    %cst_38 = arith.constant 0.000000e+00 : f32
    %73 = vector.broadcast %cst_38 : f32 to vector<8x128xf32>
    %74 = arith.select %71, %68, %73 : vector<8x128xf32>
    %75 = arith.addf %35, %74 : vector<8x128xf32>
    %c1_i32 = arith.constant 1 : i32
    %c8_i32_39 = arith.constant 8 : i32
    %76 = arith.muli %c1_i32, %c8_i32_39 : i32
    %77 = tpu.assume_multiple %76, 8 : i32
    %78 = arith.index_cast %77 : i32 to index
    %c0_40 = arith.constant 0 : index
    %79 = vector.load %arg15[%78, %c0_40] : memref<64x384xf32, #tpu.memory_space<vmem>>, vector<8x384xf32>
    %80 = arith.truncf %72 : vector<8x128xf32> to vector<8x128xbf16>
    %cst_41 = arith.constant dense<0.000000e+00> : vector<8x384xf32>
    %81 = tpu.matmul %80, %30, %cst_41 {dimension_numbers = #tpu.dot_dimension_numbers<[1], [0], [0], [1], [0, 0, 1, 1], [], []>} : vector<8x128xbf16>, vector<128x384xbf16>, vector<8x384xf32> -> vector<8x384xf32>
    %82 = arith.addf %81, %33 : vector<8x384xf32>
    %83 = vector.extract_strided_slice %79 {offsets = [0, 0], sizes = [8, 128], strides = [1, 1]} : vector<8x384xf32> to vector<8x128xf32>
    %84 = vector.extract_strided_slice %82 {offsets = [0, 0], sizes = [8, 128], strides = [1, 1]} : vector<8x384xf32> to vector<8x128xf32>
    %85 = arith.addf %83, %84 : vector<8x128xf32>
    %86 = arith.negf %85 : vector<8x128xf32>
    %87 = math.exp %86 : vector<8x128xf32>
    %cst_42 = arith.constant 1.000000e+00 : f32
    %88 = vector.broadcast %cst_42 : f32 to vector<8x128xf32>
    %89 = arith.addf %88, %87 : vector<8x128xf32>
    %90 = arith.divf %88, %89 : vector<8x128xf32>
    %91 = vector.extract_strided_slice %79 {offsets = [0, 128], sizes = [8, 128], strides = [1, 1]} : vector<8x384xf32> to vector<8x128xf32>
    %92 = vector.extract_strided_slice %82 {offsets = [0, 128], sizes = [8, 128], strides = [1, 1]} : vector<8x384xf32> to vector<8x128xf32>
    %93 = arith.addf %91, %92 : vector<8x128xf32>
    %94 = arith.negf %93 : vector<8x128xf32>
    %95 = math.exp %94 : vector<8x128xf32>
    %cst_43 = arith.constant 1.000000e+00 : f32
    %96 = vector.broadcast %cst_43 : f32 to vector<8x128xf32>
    %97 = arith.addf %96, %95 : vector<8x128xf32>
    %98 = arith.divf %96, %97 : vector<8x128xf32>
    %99 = vector.extract_strided_slice %79 {offsets = [0, 256], sizes = [8, 128], strides = [1, 1]} : vector<8x384xf32> to vector<8x128xf32>
    %100 = vector.extract_strided_slice %82 {offsets = [0, 256], sizes = [8, 128], strides = [1, 1]} : vector<8x384xf32> to vector<8x128xf32>
    %101 = arith.mulf %90, %100 : vector<8x128xf32>
    %102 = arith.addf %99, %101 : vector<8x128xf32>
    %103 = math.tanh %102 : vector<8x128xf32>
    %cst_44 = arith.constant 1.000000e+00 : f32
    %104 = vector.broadcast %cst_44 : f32 to vector<8x128xf32>
    %105 = arith.subf %104, %98 : vector<8x128xf32>
    %106 = arith.mulf %105, %103 : vector<8x128xf32>
    %107 = arith.mulf %98, %72 : vector<8x128xf32>
    %108 = arith.addf %106, %107 : vector<8x128xf32>
    %c8_i32_45 = arith.constant 8 : i32
    %109 = arith.muli %arg0, %c8_i32_45 : i32
    %110 = arith.addi %109, %c1_i32 : i32
    %c8_i32_46 = arith.constant 8 : i32
    %111 = arith.cmpi slt, %110, %c8_i32_46 : i32
    %112 = arith.select %111, %108, %72 : vector<8x128xf32>
    %cst_47 = arith.constant 0.000000e+00 : f32
    %113 = vector.broadcast %cst_47 : f32 to vector<8x128xf32>
    %114 = arith.select %111, %108, %113 : vector<8x128xf32>
    %115 = arith.addf %75, %114 : vector<8x128xf32>
    %c2_i32 = arith.constant 2 : i32
    %c8_i32_48 = arith.constant 8 : i32
    %116 = arith.muli %c2_i32, %c8_i32_48 : i32
    %117 = tpu.assume_multiple %116, 8 : i32
    %118 = arith.index_cast %117 : i32 to index
    %c0_49 = arith.constant 0 : index
    %119 = vector.load %arg15[%118, %c0_49] : memref<64x384xf32, #tpu.memory_space<vmem>>, vector<8x384xf32>
    %120 = arith.truncf %112 : vector<8x128xf32> to vector<8x128xbf16>
    %cst_50 = arith.constant dense<0.000000e+00> : vector<8x384xf32>
    %121 = tpu.matmul %120, %30, %cst_50 {dimension_numbers = #tpu.dot_dimension_numbers<[1], [0], [0], [1], [0, 0, 1, 1], [], []>} : vector<8x128xbf16>, vector<128x384xbf16>, vector<8x384xf32> -> vector<8x384xf32>
    %122 = arith.addf %121, %33 : vector<8x384xf32>
    %123 = vector.extract_strided_slice %119 {offsets = [0, 0], sizes = [8, 128], strides = [1, 1]} : vector<8x384xf32> to vector<8x128xf32>
    %124 = vector.extract_strided_slice %122 {offsets = [0, 0], sizes = [8, 128], strides = [1, 1]} : vector<8x384xf32> to vector<8x128xf32>
    %125 = arith.addf %123, %124 : vector<8x128xf32>
    %126 = arith.negf %125 : vector<8x128xf32>
    %127 = math.exp %126 : vector<8x128xf32>
    %cst_51 = arith.constant 1.000000e+00 : f32
    %128 = vector.broadcast %cst_51 : f32 to vector<8x128xf32>
    %129 = arith.addf %128, %127 : vector<8x128xf32>
    %130 = arith.divf %128, %129 : vector<8x128xf32>
    %131 = vector.extract_strided_slice %119 {offsets = [0, 128], sizes = [8, 128], strides = [1, 1]} : vector<8x384xf32> to vector<8x128xf32>
    %132 = vector.extract_strided_slice %122 {offsets = [0, 128], sizes = [8, 128], strides = [1, 1]} : vector<8x384xf32> to vector<8x128xf32>
    %133 = arith.addf %131, %132 : vector<8x128xf32>
    %134 = arith.negf %133 : vector<8x128xf32>
    %135 = math.exp %134 : vector<8x128xf32>
    %cst_52 = arith.constant 1.000000e+00 : f32
    %136 = vector.broadcast %cst_52 : f32 to vector<8x128xf32>
    %137 = arith.addf %136, %135 : vector<8x128xf32>
    %138 = arith.divf %136, %137 : vector<8x128xf32>
    %139 = vector.extract_strided_slice %119 {offsets = [0, 256], sizes = [8, 128], strides = [1, 1]} : vector<8x384xf32> to vector<8x128xf32>
    %140 = vector.extract_strided_slice %122 {offsets = [0, 256], sizes = [8, 128], strides = [1, 1]} : vector<8x384xf32> to vector<8x128xf32>
    %141 = arith.mulf %130, %140 : vector<8x128xf32>
    %142 = arith.addf %139, %141 : vector<8x128xf32>
    %143 = math.tanh %142 : vector<8x128xf32>
    %cst_53 = arith.constant 1.000000e+00 : f32
    %144 = vector.broadcast %cst_53 : f32 to vector<8x128xf32>
    %145 = arith.subf %144, %138 : vector<8x128xf32>
    %146 = arith.mulf %145, %143 : vector<8x128xf32>
    %147 = arith.mulf %138, %112 : vector<8x128xf32>
    %148 = arith.addf %146, %147 : vector<8x128xf32>
    %c8_i32_54 = arith.constant 8 : i32
    %149 = arith.muli %arg0, %c8_i32_54 : i32
    %150 = arith.addi %149, %c2_i32 : i32
    %c8_i32_55 = arith.constant 8 : i32
    %151 = arith.cmpi slt, %150, %c8_i32_55 : i32
    %152 = arith.select %151, %148, %112 : vector<8x128xf32>
    %cst_56 = arith.constant 0.000000e+00 : f32
    %153 = vector.broadcast %cst_56 : f32 to vector<8x128xf32>
    %154 = arith.select %151, %148, %153 : vector<8x128xf32>
    %155 = arith.addf %115, %154 : vector<8x128xf32>
    %c3_i32 = arith.constant 3 : i32
    %c8_i32_57 = arith.constant 8 : i32
    %156 = arith.muli %c3_i32, %c8_i32_57 : i32
    %157 = tpu.assume_multiple %156, 8 : i32
    %158 = arith.index_cast %157 : i32 to index
    %c0_58 = arith.constant 0 : index
    %159 = vector.load %arg15[%158, %c0_58] : memref<64x384xf32, #tpu.memory_space<vmem>>, vector<8x384xf32>
    %160 = arith.truncf %152 : vector<8x128xf32> to vector<8x128xbf16>
    %cst_59 = arith.constant dense<0.000000e+00> : vector<8x384xf32>
    %161 = tpu.matmul %160, %30, %cst_59 {dimension_numbers = #tpu.dot_dimension_numbers<[1], [0], [0], [1], [0, 0, 1, 1], [], []>} : vector<8x128xbf16>, vector<128x384xbf16>, vector<8x384xf32> -> vector<8x384xf32>
    %162 = arith.addf %161, %33 : vector<8x384xf32>
    %163 = vector.extract_strided_slice %159 {offsets = [0, 0], sizes = [8, 128], strides = [1, 1]} : vector<8x384xf32> to vector<8x128xf32>
    %164 = vector.extract_strided_slice %162 {offsets = [0, 0], sizes = [8, 128], strides = [1, 1]} : vector<8x384xf32> to vector<8x128xf32>
    %165 = arith.addf %163, %164 : vector<8x128xf32>
    %166 = arith.negf %165 : vector<8x128xf32>
    %167 = math.exp %166 : vector<8x128xf32>
    %cst_60 = arith.constant 1.000000e+00 : f32
    %168 = vector.broadcast %cst_60 : f32 to vector<8x128xf32>
    %169 = arith.addf %168, %167 : vector<8x128xf32>
    %170 = arith.divf %168, %169 : vector<8x128xf32>
    %171 = vector.extract_strided_slice %159 {offsets = [0, 128], sizes = [8, 128], strides = [1, 1]} : vector<8x384xf32> to vector<8x128xf32>
    %172 = vector.extract_strided_slice %162 {offsets = [0, 128], sizes = [8, 128], strides = [1, 1]} : vector<8x384xf32> to vector<8x128xf32>
    %173 = arith.addf %171, %172 : vector<8x128xf32>
    %174 = arith.negf %173 : vector<8x128xf32>
    %175 = math.exp %174 : vector<8x128xf32>
    %cst_61 = arith.constant 1.000000e+00 : f32
    %176 = vector.broadcast %cst_61 : f32 to vector<8x128xf32>
    %177 = arith.addf %176, %175 : vector<8x128xf32>
    %178 = arith.divf %176, %177 : vector<8x128xf32>
    %179 = vector.extract_strided_slice %159 {offsets = [0, 256], sizes = [8, 128], strides = [1, 1]} : vector<8x384xf32> to vector<8x128xf32>
    %180 = vector.extract_strided_slice %162 {offsets = [0, 256], sizes = [8, 128], strides = [1, 1]} : vector<8x384xf32> to vector<8x128xf32>
    %181 = arith.mulf %170, %180 : vector<8x128xf32>
    %182 = arith.addf %179, %181 : vector<8x128xf32>
    %183 = math.tanh %182 : vector<8x128xf32>
    %cst_62 = arith.constant 1.000000e+00 : f32
    %184 = vector.broadcast %cst_62 : f32 to vector<8x128xf32>
    %185 = arith.subf %184, %178 : vector<8x128xf32>
    %186 = arith.mulf %185, %183 : vector<8x128xf32>
    %187 = arith.mulf %178, %152 : vector<8x128xf32>
    %188 = arith.addf %186, %187 : vector<8x128xf32>
    %c8_i32_63 = arith.constant 8 : i32
    %189 = arith.muli %arg0, %c8_i32_63 : i32
    %190 = arith.addi %189, %c3_i32 : i32
    %c8_i32_64 = arith.constant 8 : i32
    %191 = arith.cmpi slt, %190, %c8_i32_64 : i32
    %192 = arith.select %191, %188, %152 : vector<8x128xf32>
    %cst_65 = arith.constant 0.000000e+00 : f32
    %193 = vector.broadcast %cst_65 : f32 to vector<8x128xf32>
    %194 = arith.select %191, %188, %193 : vector<8x128xf32>
    %195 = arith.addf %155, %194 : vector<8x128xf32>
    %c4_i32 = arith.constant 4 : i32
    %c8_i32_66 = arith.constant 8 : i32
    %196 = arith.muli %c4_i32, %c8_i32_66 : i32
    %197 = tpu.assume_multiple %196, 8 : i32
    %198 = arith.index_cast %197 : i32 to index
    %c0_67 = arith.constant 0 : index
    %199 = vector.load %arg15[%198, %c0_67] : memref<64x384xf32, #tpu.memory_space<vmem>>, vector<8x384xf32>
    %200 = arith.truncf %192 : vector<8x128xf32> to vector<8x128xbf16>
    %cst_68 = arith.constant dense<0.000000e+00> : vector<8x384xf32>
    %201 = tpu.matmul %200, %30, %cst_68 {dimension_numbers = #tpu.dot_dimension_numbers<[1], [0], [0], [1], [0, 0, 1, 1], [], []>} : vector<8x128xbf16>, vector<128x384xbf16>, vector<8x384xf32> -> vector<8x384xf32>
    %202 = arith.addf %201, %33 : vector<8x384xf32>
    %203 = vector.extract_strided_slice %199 {offsets = [0, 0], sizes = [8, 128], strides = [1, 1]} : vector<8x384xf32> to vector<8x128xf32>
    %204 = vector.extract_strided_slice %202 {offsets = [0, 0], sizes = [8, 128], strides = [1, 1]} : vector<8x384xf32> to vector<8x128xf32>
    %205 = arith.addf %203, %204 : vector<8x128xf32>
    %206 = arith.negf %205 : vector<8x128xf32>
    %207 = math.exp %206 : vector<8x128xf32>
    %cst_69 = arith.constant 1.000000e+00 : f32
    %208 = vector.broadcast %cst_69 : f32 to vector<8x128xf32>
    %209 = arith.addf %208, %207 : vector<8x128xf32>
    %210 = arith.divf %208, %209 : vector<8x128xf32>
    %211 = vector.extract_strided_slice %199 {offsets = [0, 128], sizes = [8, 128], strides = [1, 1]} : vector<8x384xf32> to vector<8x128xf32>
    %212 = vector.extract_strided_slice %202 {offsets = [0, 128], sizes = [8, 128], strides = [1, 1]} : vector<8x384xf32> to vector<8x128xf32>
    %213 = arith.addf %211, %212 : vector<8x128xf32>
    %214 = arith.negf %213 : vector<8x128xf32>
    %215 = math.exp %214 : vector<8x128xf32>
    %cst_70 = arith.constant 1.000000e+00 : f32
    %216 = vector.broadcast %cst_70 : f32 to vector<8x128xf32>
    %217 = arith.addf %216, %215 : vector<8x128xf32>
    %218 = arith.divf %216, %217 : vector<8x128xf32>
    %219 = vector.extract_strided_slice %199 {offsets = [0, 256], sizes = [8, 128], strides = [1, 1]} : vector<8x384xf32> to vector<8x128xf32>
    %220 = vector.extract_strided_slice %202 {offsets = [0, 256], sizes = [8, 128], strides = [1, 1]} : vector<8x384xf32> to vector<8x128xf32>
    %221 = arith.mulf %210, %220 : vector<8x128xf32>
    %222 = arith.addf %219, %221 : vector<8x128xf32>
    %223 = math.tanh %222 : vector<8x128xf32>
    %cst_71 = arith.constant 1.000000e+00 : f32
    %224 = vector.broadcast %cst_71 : f32 to vector<8x128xf32>
    %225 = arith.subf %224, %218 : vector<8x128xf32>
    %226 = arith.mulf %225, %223 : vector<8x128xf32>
    %227 = arith.mulf %218, %192 : vector<8x128xf32>
    %228 = arith.addf %226, %227 : vector<8x128xf32>
    %c8_i32_72 = arith.constant 8 : i32
    %229 = arith.muli %arg0, %c8_i32_72 : i32
    %230 = arith.addi %229, %c4_i32 : i32
    %c8_i32_73 = arith.constant 8 : i32
    %231 = arith.cmpi slt, %230, %c8_i32_73 : i32
    %232 = arith.select %231, %228, %192 : vector<8x128xf32>
    %cst_74 = arith.constant 0.000000e+00 : f32
    %233 = vector.broadcast %cst_74 : f32 to vector<8x128xf32>
    %234 = arith.select %231, %228, %233 : vector<8x128xf32>
    %235 = arith.addf %195, %234 : vector<8x128xf32>
    %c5_i32 = arith.constant 5 : i32
    %c8_i32_75 = arith.constant 8 : i32
    %236 = arith.muli %c5_i32, %c8_i32_75 : i32
    %237 = tpu.assume_multiple %236, 8 : i32
    %238 = arith.index_cast %237 : i32 to index
    %c0_76 = arith.constant 0 : index
    %239 = vector.load %arg15[%238, %c0_76] : memref<64x384xf32, #tpu.memory_space<vmem>>, vector<8x384xf32>
    %240 = arith.truncf %232 : vector<8x128xf32> to vector<8x128xbf16>
    %cst_77 = arith.constant dense<0.000000e+00> : vector<8x384xf32>
    %241 = tpu.matmul %240, %30, %cst_77 {dimension_numbers = #tpu.dot_dimension_numbers<[1], [0], [0], [1], [0, 0, 1, 1], [], []>} : vector<8x128xbf16>, vector<128x384xbf16>, vector<8x384xf32> -> vector<8x384xf32>
    %242 = arith.addf %241, %33 : vector<8x384xf32>
    %243 = vector.extract_strided_slice %239 {offsets = [0, 0], sizes = [8, 128], strides = [1, 1]} : vector<8x384xf32> to vector<8x128xf32>
    %244 = vector.extract_strided_slice %242 {offsets = [0, 0], sizes = [8, 128], strides = [1, 1]} : vector<8x384xf32> to vector<8x128xf32>
    %245 = arith.addf %243, %244 : vector<8x128xf32>
    %246 = arith.negf %245 : vector<8x128xf32>
    %247 = math.exp %246 : vector<8x128xf32>
    %cst_78 = arith.constant 1.000000e+00 : f32
    %248 = vector.broadcast %cst_78 : f32 to vector<8x128xf32>
    %249 = arith.addf %248, %247 : vector<8x128xf32>
    %250 = arith.divf %248, %249 : vector<8x128xf32>
    %251 = vector.extract_strided_slice %239 {offsets = [0, 128], sizes = [8, 128], strides = [1, 1]} : vector<8x384xf32> to vector<8x128xf32>
    %252 = vector.extract_strided_slice %242 {offsets = [0, 128], sizes = [8, 128], strides = [1, 1]} : vector<8x384xf32> to vector<8x128xf32>
    %253 = arith.addf %251, %252 : vector<8x128xf32>
    %254 = arith.negf %253 : vector<8x128xf32>
    %255 = math.exp %254 : vector<8x128xf32>
    %cst_79 = arith.constant 1.000000e+00 : f32
    %256 = vector.broadcast %cst_79 : f32 to vector<8x128xf32>
    %257 = arith.addf %256, %255 : vector<8x128xf32>
    %258 = arith.divf %256, %257 : vector<8x128xf32>
    %259 = vector.extract_strided_slice %239 {offsets = [0, 256], sizes = [8, 128], strides = [1, 1]} : vector<8x384xf32> to vector<8x128xf32>
    %260 = vector.extract_strided_slice %242 {offsets = [0, 256], sizes = [8, 128], strides = [1, 1]} : vector<8x384xf32> to vector<8x128xf32>
    %261 = arith.mulf %250, %260 : vector<8x128xf32>
    %262 = arith.addf %259, %261 : vector<8x128xf32>
    %263 = math.tanh %262 : vector<8x128xf32>
    %cst_80 = arith.constant 1.000000e+00 : f32
    %264 = vector.broadcast %cst_80 : f32 to vector<8x128xf32>
    %265 = arith.subf %264, %258 : vector<8x128xf32>
    %266 = arith.mulf %265, %263 : vector<8x128xf32>
    %267 = arith.mulf %258, %232 : vector<8x128xf32>
    %268 = arith.addf %266, %267 : vector<8x128xf32>
    %c8_i32_81 = arith.constant 8 : i32
    %269 = arith.muli %arg0, %c8_i32_81 : i32
    %270 = arith.addi %269, %c5_i32 : i32
    %c8_i32_82 = arith.constant 8 : i32
    %271 = arith.cmpi slt, %270, %c8_i32_82 : i32
    %272 = arith.select %271, %268, %232 : vector<8x128xf32>
    %cst_83 = arith.constant 0.000000e+00 : f32
    %273 = vector.broadcast %cst_83 : f32 to vector<8x128xf32>
    %274 = arith.select %271, %268, %273 : vector<8x128xf32>
    %275 = arith.addf %235, %274 : vector<8x128xf32>
    %c6_i32 = arith.constant 6 : i32
    %c8_i32_84 = arith.constant 8 : i32
    %276 = arith.muli %c6_i32, %c8_i32_84 : i32
    %277 = tpu.assume_multiple %276, 8 : i32
    %278 = arith.index_cast %277 : i32 to index
    %c0_85 = arith.constant 0 : index
    %279 = vector.load %arg15[%278, %c0_85] : memref<64x384xf32, #tpu.memory_space<vmem>>, vector<8x384xf32>
    %280 = arith.truncf %272 : vector<8x128xf32> to vector<8x128xbf16>
    %cst_86 = arith.constant dense<0.000000e+00> : vector<8x384xf32>
    %281 = tpu.matmul %280, %30, %cst_86 {dimension_numbers = #tpu.dot_dimension_numbers<[1], [0], [0], [1], [0, 0, 1, 1], [], []>} : vector<8x128xbf16>, vector<128x384xbf16>, vector<8x384xf32> -> vector<8x384xf32>
    %282 = arith.addf %281, %33 : vector<8x384xf32>
    %283 = vector.extract_strided_slice %279 {offsets = [0, 0], sizes = [8, 128], strides = [1, 1]} : vector<8x384xf32> to vector<8x128xf32>
    %284 = vector.extract_strided_slice %282 {offsets = [0, 0], sizes = [8, 128], strides = [1, 1]} : vector<8x384xf32> to vector<8x128xf32>
    %285 = arith.addf %283, %284 : vector<8x128xf32>
    %286 = arith.negf %285 : vector<8x128xf32>
    %287 = math.exp %286 : vector<8x128xf32>
    %cst_87 = arith.constant 1.000000e+00 : f32
    %288 = vector.broadcast %cst_87 : f32 to vector<8x128xf32>
    %289 = arith.addf %288, %287 : vector<8x128xf32>
    %290 = arith.divf %288, %289 : vector<8x128xf32>
    %291 = vector.extract_strided_slice %279 {offsets = [0, 128], sizes = [8, 128], strides = [1, 1]} : vector<8x384xf32> to vector<8x128xf32>
    %292 = vector.extract_strided_slice %282 {offsets = [0, 128], sizes = [8, 128], strides = [1, 1]} : vector<8x384xf32> to vector<8x128xf32>
    %293 = arith.addf %291, %292 : vector<8x128xf32>
    %294 = arith.negf %293 : vector<8x128xf32>
    %295 = math.exp %294 : vector<8x128xf32>
    %cst_88 = arith.constant 1.000000e+00 : f32
    %296 = vector.broadcast %cst_88 : f32 to vector<8x128xf32>
    %297 = arith.addf %296, %295 : vector<8x128xf32>
    %298 = arith.divf %296, %297 : vector<8x128xf32>
    %299 = vector.extract_strided_slice %279 {offsets = [0, 256], sizes = [8, 128], strides = [1, 1]} : vector<8x384xf32> to vector<8x128xf32>
    %300 = vector.extract_strided_slice %282 {offsets = [0, 256], sizes = [8, 128], strides = [1, 1]} : vector<8x384xf32> to vector<8x128xf32>
    %301 = arith.mulf %290, %300 : vector<8x128xf32>
    %302 = arith.addf %299, %301 : vector<8x128xf32>
    %303 = math.tanh %302 : vector<8x128xf32>
    %cst_89 = arith.constant 1.000000e+00 : f32
    %304 = vector.broadcast %cst_89 : f32 to vector<8x128xf32>
    %305 = arith.subf %304, %298 : vector<8x128xf32>
    %306 = arith.mulf %305, %303 : vector<8x128xf32>
    %307 = arith.mulf %298, %272 : vector<8x128xf32>
    %308 = arith.addf %306, %307 : vector<8x128xf32>
    %c8_i32_90 = arith.constant 8 : i32
    %309 = arith.muli %arg0, %c8_i32_90 : i32
    %310 = arith.addi %309, %c6_i32 : i32
    %c8_i32_91 = arith.constant 8 : i32
    %311 = arith.cmpi slt, %310, %c8_i32_91 : i32
    %312 = arith.select %311, %308, %272 : vector<8x128xf32>
    %cst_92 = arith.constant 0.000000e+00 : f32
    %313 = vector.broadcast %cst_92 : f32 to vector<8x128xf32>
    %314 = arith.select %311, %308, %313 : vector<8x128xf32>
    %315 = arith.addf %275, %314 : vector<8x128xf32>
    %c7_i32 = arith.constant 7 : i32
    %c8_i32_93 = arith.constant 8 : i32
    %316 = arith.muli %c7_i32, %c8_i32_93 : i32
    %317 = tpu.assume_multiple %316, 8 : i32
    %318 = arith.index_cast %317 : i32 to index
    %c0_94 = arith.constant 0 : index
    %319 = vector.load %arg15[%318, %c0_94] : memref<64x384xf32, #tpu.memory_space<vmem>>, vector<8x384xf32>
    %320 = arith.truncf %312 : vector<8x128xf32> to vector<8x128xbf16>
    %cst_95 = arith.constant dense<0.000000e+00> : vector<8x384xf32>
    %321 = tpu.matmul %320, %30, %cst_95 {dimension_numbers = #tpu.dot_dimension_numbers<[1], [0], [0], [1], [0, 0, 1, 1], [], []>} : vector<8x128xbf16>, vector<128x384xbf16>, vector<8x384xf32> -> vector<8x384xf32>
    %322 = arith.addf %321, %33 : vector<8x384xf32>
    %323 = vector.extract_strided_slice %319 {offsets = [0, 0], sizes = [8, 128], strides = [1, 1]} : vector<8x384xf32> to vector<8x128xf32>
    %324 = vector.extract_strided_slice %322 {offsets = [0, 0], sizes = [8, 128], strides = [1, 1]} : vector<8x384xf32> to vector<8x128xf32>
    %325 = arith.addf %323, %324 : vector<8x128xf32>
    %326 = arith.negf %325 : vector<8x128xf32>
    %327 = math.exp %326 : vector<8x128xf32>
    %cst_96 = arith.constant 1.000000e+00 : f32
    %328 = vector.broadcast %cst_96 : f32 to vector<8x128xf32>
    %329 = arith.addf %328, %327 : vector<8x128xf32>
    %330 = arith.divf %328, %329 : vector<8x128xf32>
    %331 = vector.extract_strided_slice %319 {offsets = [0, 128], sizes = [8, 128], strides = [1, 1]} : vector<8x384xf32> to vector<8x128xf32>
    %332 = vector.extract_strided_slice %322 {offsets = [0, 128], sizes = [8, 128], strides = [1, 1]} : vector<8x384xf32> to vector<8x128xf32>
    %333 = arith.addf %331, %332 : vector<8x128xf32>
    %334 = arith.negf %333 : vector<8x128xf32>
    %335 = math.exp %334 : vector<8x128xf32>
    %cst_97 = arith.constant 1.000000e+00 : f32
    %336 = vector.broadcast %cst_97 : f32 to vector<8x128xf32>
    %337 = arith.addf %336, %335 : vector<8x128xf32>
    %338 = arith.divf %336, %337 : vector<8x128xf32>
    %339 = vector.extract_strided_slice %319 {offsets = [0, 256], sizes = [8, 128], strides = [1, 1]} : vector<8x384xf32> to vector<8x128xf32>
    %340 = vector.extract_strided_slice %322 {offsets = [0, 256], sizes = [8, 128], strides = [1, 1]} : vector<8x384xf32> to vector<8x128xf32>
    %341 = arith.mulf %330, %340 : vector<8x128xf32>
    %342 = arith.addf %339, %341 : vector<8x128xf32>
    %343 = math.tanh %342 : vector<8x128xf32>
    %cst_98 = arith.constant 1.000000e+00 : f32
    %344 = vector.broadcast %cst_98 : f32 to vector<8x128xf32>
    %345 = arith.subf %344, %338 : vector<8x128xf32>
    %346 = arith.mulf %345, %343 : vector<8x128xf32>
    %347 = arith.mulf %338, %312 : vector<8x128xf32>
    %348 = arith.addf %346, %347 : vector<8x128xf32>
    %c8_i32_99 = arith.constant 8 : i32
    %349 = arith.muli %arg0, %c8_i32_99 : i32
    %350 = arith.addi %349, %c7_i32 : i32
    %c8_i32_100 = arith.constant 8 : i32
    %351 = arith.cmpi slt, %350, %c8_i32_100 : i32
    %352 = arith.select %351, %348, %312 : vector<8x128xf32>
    %cst_101 = arith.constant 0.000000e+00 : f32
    %353 = vector.broadcast %cst_101 : f32 to vector<8x128xf32>
    %354 = arith.select %351, %348, %353 : vector<8x128xf32>
    %355 = arith.addf %315, %354 : vector<8x128xf32>
    %c8_i32_102 = arith.constant 8 : i32
    %c0_103 = arith.constant 0 : index
    %c0_104 = arith.constant 0 : index
    %356 = vector.load %arg13[%c0_103, %c0_104] : memref<8x128xf32, #tpu.memory_space<vmem>>, vector<8x128xf32>
    tpu.vector_store %arg13[%c0_103, %c0_104], %352 {strides = array<i32>} : memref<8x128xf32, #tpu.memory_space<vmem>>, vector<8x128xf32>,
    %c0_105 = arith.constant 0 : index
    %c0_106 = arith.constant 0 : index
    %357 = vector.load %arg14[%c0_105, %c0_106] : memref<8x128xf32, #tpu.memory_space<vmem>>, vector<8x128xf32>
    tpu.vector_store %arg14[%c0_105, %c0_106], %355 {strides = array<i32>} : memref<8x128xf32, #tpu.memory_space<vmem>>, vector<8x128xf32>,
    %c0_i32_107 = arith.constant 0 : i32
    %358 = arith.cmpi eq, %arg0, %c0_i32_107 : i32
    %359 = arith.extui %358 : i1 to i32
    %c0_i32_108 = arith.constant 0 : i32
    %360 = arith.cmpi ne, %359, %c0_i32_108 : i32
    scf.if %360 {
      %c0_109 = arith.constant 0 : index
      %c0_110 = arith.constant 0 : index
      %361 = vector.load %arg14[%c0_109, %c0_110] : memref<8x128xf32, #tpu.memory_space<vmem>>, vector<8x128xf32>
      %cst_111 = arith.constant 1.250000e-01 : f32
      %362 = vector.broadcast %cst_111 : f32 to vector<8x128xf32>
      %363 = arith.mulf %361, %362 : vector<8x128xf32>
      %364 = arith.truncf %363 : vector<8x128xf32> to vector<8x128xbf16>
      %c0_112 = arith.constant 0 : index
      %c0_113 = arith.constant 0 : index
      %365 = vector.load %arg10[%c0_112, %c0_113] : memref<128x128xbf16, #tpu.memory_space<vmem>>, vector<128x128xbf16>
      %cst_114 = arith.constant dense<0.000000e+00> : vector<8x128xf32>
      %366 = tpu.matmul %364, %365, %cst_114 {dimension_numbers = #tpu.dot_dimension_numbers<[1], [0], [0], [1], [0, 0, 1, 1], [], []>} : vector<8x128xbf16>, vector<128x128xbf16>, vector<8x128xf32> -> vector<8x128xf32>
      %c0_115 = arith.constant 0 : index
      %c0_116 = arith.constant 0 : index
      %367 = vector.load %arg11[%c0_115, %c0_116] : memref<1x128xf32, #tpu.memory_space<vmem>>, vector<1x128xf32>
      %368 = vector.broadcast %367 : vector<1x128xf32> to vector<8x128xf32>
      %369 = arith.addf %366, %368 : vector<8x128xf32>
      %c0_117 = arith.constant 0 : index
      %c0_118 = arith.constant 0 : index
      %370 = vector.load %arg12[%c0_117, %c0_118] : memref<8x128xf32, #tpu.memory_space<vmem>>, vector<8x128xf32>
      tpu.vector_store %arg12[%c0_117, %c0_118], %369 {strides = array<i32>} : memref<8x128xf32, #tpu.memory_space<vmem>>, vector<8x128xf32>,
    } else {
    }
    return
  }
  func.func @transform_0(%arg0: i32) -> (i32, i32) {
    %c0_i32 = arith.constant 0 : i32
    %c0_i32_0 = arith.constant 0 : i32
    return %arg0, %c0_i32 : i32, i32
  }
  func.func @transform_1(%arg0: i32) -> (i32, i32) {
    %c0_i32 = arith.constant 0 : i32
    %c0_i32_0 = arith.constant 0 : i32
    %c0_i32_1 = arith.constant 0 : i32
    return %c0_i32, %c0_i32_0 : i32, i32
  }
  func.func @transform_2(%arg0: i32) -> (i32, i32) {
    %c0_i32 = arith.constant 0 : i32
    %c0_i32_0 = arith.constant 0 : i32
    %c0_i32_1 = arith.constant 0 : i32
    return %c0_i32, %c0_i32_0 : i32, i32
  }
  func.func @transform_3(%arg0: i32) -> (i32, i32) {
    %c0_i32 = arith.constant 0 : i32
    %c0_i32_0 = arith.constant 0 : i32
    %c0_i32_1 = arith.constant 0 : i32
    return %c0_i32, %c0_i32_0 : i32, i32
  }
  func.func @transform_4(%arg0: i32) -> (i32, i32) {
    %c0_i32 = arith.constant 0 : i32
    %c0_i32_0 = arith.constant 0 : i32
    %c0_i32_1 = arith.constant 0 : i32
    return %c0_i32, %c0_i32_0 : i32, i32
  }
  func.func @transform_5(%arg0: i32) -> (i32, i32) {
    %c0_i32 = arith.constant 0 : i32
    %c0_i32_0 = arith.constant 0 : i32
    %c0_i32_1 = arith.constant 0 : i32
    return %c0_i32, %c0_i32_0 : i32, i32
  }
  func.func @transform_6(%arg0: i32) -> (i32, i32) {
    %c0_i32 = arith.constant 0 : i32
    %c0_i32_0 = arith.constant 0 : i32
    %c0_i32_1 = arith.constant 0 : i32
    return %c0_i32, %c0_i32_0 : i32, i32
  }
  func.func @transform_7(%arg0: i32) -> (i32, i32) {
    %c0_i32 = arith.constant 0 : i32
    %c0_i32_0 = arith.constant 0 : i32
    %c0_i32_1 = arith.constant 0 : i32
    return %c0_i32, %c0_i32_0 : i32, i32
  }
  func.func @transform_8(%arg0: i32) -> (i32, i32) {
    %c0_i32 = arith.constant 0 : i32
    %c0_i32_0 = arith.constant 0 : i32
    %c0_i32_1 = arith.constant 0 : i32
    return %c0_i32, %c0_i32_0 : i32, i32
  }
  func.func @transform_9(%arg0: i32) -> (i32, i32) {
    %c0_i32 = arith.constant 0 : i32
    %c0_i32_0 = arith.constant 0 : i32
    %c0_i32_1 = arith.constant 0 : i32
    return %c0_i32, %c0_i32_0 : i32, i32
  }
  func.func @transform_10(%arg0: i32) -> (i32, i32) {
    %c0_i32 = arith.constant 0 : i32
    %c0_i32_0 = arith.constant 0 : i32
    %c0_i32_1 = arith.constant 0 : i32
    return %c0_i32, %c0_i32_0 : i32, i32
  }
  func.func @transform_11(%arg0: i32) -> (i32, i32) {
    %c0_i32 = arith.constant 0 : i32
    %c0_i32_0 = arith.constant 0 : i32
    %c0_i32_1 = arith.constant 0 : i32
    return %c0_i32, %c0_i32_0 : i32, i32
  }
}

</mosaic_0001>

<llo_original>
// kernel: tpu_custom_call.1
$region0: #{tpu_custom_call.1}
  #allocation0 [shape = 'u32[]', space=smem, size = 0x4, offset = 0x4, fixed_abs, tag = 'smem constant byte address 0x4 - core index']
  #allocation1 [shape = 'u32[144,128]{1,0:T(1,128)}', space=vmem, size = 0x12000, scoped, tag = 'internal scratch']
  #allocation2 [shape = 'f32[8,128]{1,0:T(8,128)}', space=vmem, size = 0x1000, scoped, tag = 'scratch operand']
  #allocation3 [shape = 'f32[8,128]{1,0:T(8,128)}', space=vmem, size = 0x1000, scoped, tag = 'scratch operand']
  #allocation4 [shape = 'f32[64,384]{1,0:T(8,128)}', space=vmem, size = 0x18000, scoped, tag = 'scratch operand']
  %s0 = inlined_call_operand.vmem [shape: bf16[64,32], index: 0, kind: input, shape index: {}]
  %s1 = inlined_call_operand.hbm [shape: bf16[32,256], index: 1, kind: input, shape index: {}]
  %s2 = inlined_call_operand.vmem [shape: f32[1,256], index: 2, kind: input, shape index: {}]
  %s3 = inlined_call_operand.hbm [shape: bf16[256,128], index: 3, kind: input, shape index: {}]
  %s4 = inlined_call_operand.vmem [shape: f32[1,128], index: 4, kind: input, shape index: {}]
  %s5 = inlined_call_operand.hbm [shape: bf16[128,384], index: 5, kind: input, shape index: {}]
  %s6 = inlined_call_operand.vmem [shape: f32[1,384], index: 6, kind: input, shape index: {}]
  %s7 = inlined_call_operand.hbm [shape: bf16[128,384], index: 7, kind: input, shape index: {}]
  %s8 = inlined_call_operand.vmem [shape: f32[1,384], index: 8, kind: input, shape index: {}]
  %s9 = inlined_call_operand.vmem [shape: bf16[128,128], index: 9, kind: input, shape index: {}]
  %s10 = inlined_call_operand.vmem [shape: f32[1,128], index: 10, kind: input, shape index: {}]
  %s11 = inlined_call_operand.hbm [shape: f32[8,128], index: 11, kind: output, shape index: {}]
  %s12 = sld [smem:[#allocation0]]
  $region78: #{tpu_custom_call.1} parent=0
    _
  %s14 = ssub.s32 1, %s12
  %s15 = scalar_select 0, %s14, %s12
  $region1: #{tpu_custom_call.1} parent=0
    #allocation5 [shape = 'u8[16384]{0}', space=vmem, size = 0x4000, scoped, tag = 'input window, operand 1, single buffered']
    #allocation6 [shape = 's32[1]{0}', space=sflag, size = 0x4, scoped, tag = 'scoped memory for tpu_custom_call.1']
    #allocation7 [shape = 's32[1]{0}', space=sflag, size = 0x4, scoped, tag = 'scoped memory for tpu_custom_call.1']
    #allocation8 [shape = 'u8[65536]{0}', space=vmem, size = 0x10000, scoped, tag = 'input window, operand 3, single buffered']
    #allocation9 [shape = 's32[1]{0}', space=sflag, size = 0x4, scoped, tag = 'scoped memory for tpu_custom_call.1']
    #allocation10 [shape = 'u8[98304]{0}', space=vmem, size = 0x18000, scoped, tag = 'input window, operand 5, single buffered']
    #allocation11 [shape = 'u8[98304]{0}', space=vmem, size = 0x18000, scoped, tag = 'input window, operand 7, single buffered']
    #allocation12 [shape = 's32[1]{0}', space=sflag, size = 0x4, scoped, tag = 'scoped memory for tpu_custom_call.1']
    #allocation13 [shape = 'u8[4096]{0}', space=vmem, size = 0x1000, scoped, tag = 'output window, operand 0, single buffered']
    %16 = vsyncpa [#allocation6], 0
    %17 = vsyncpa [#allocation9], 0
    %18 = vsyncpa [#allocation12], 0
    %19 = vsyncpa [#allocation7], 0
    // Predicated region
    $region2: #{tpu_custom_call.1} parent=1 // pred_check
      _
    $region3: #{tpu_custom_call.1} parent=1 // pred_check_branch
      %21 = sbr.rel (0) target = $region5
    $region4: #{tpu_custom_call.1} parent=1 // pred_region
      _
    $region5: #{tpu_custom_call.1} parent=1 // pred_fallthru
      _
    // Predicated region
    $region6: #{tpu_custom_call.1} parent=1 // pred_check
      _
    $region7: #{tpu_custom_call.1} parent=1 // pred_check_branch
      %23 = sbr.rel (0) target = $region9
    $region8: #{tpu_custom_call.1} parent=1 // pred_region
      %s25 = ssub.s32 512, 512
      %26 = vsyncadd [#allocation6], %s25
      %s27 = sshll.u32 [#allocation5], 4
      %s28 = int_to_ptr.vmem [resolvable:$true] %s27
      %33 = dma.hbm_to_vmem [thread:$0]  %s1, 512, %s28, [#allocation6], 128, 128, 8
    $region9: #{tpu_custom_call.1} parent=1 // pred_fallthru
      _
    // Predicated region
    $region10: #{tpu_custom_call.1} parent=1 // pred_check
      _
    $region11: #{tpu_custom_call.1} parent=1 // pred_check_branch
      %35 = sbr.rel (0) target = $region13
    $region12: #{tpu_custom_call.1} parent=1 // pred_region
      _
    $region13: #{tpu_custom_call.1} parent=1 // pred_fallthru
      _
    // Predicated region
    $region14: #{tpu_custom_call.1} parent=1 // pred_check
      _
    $region15: #{tpu_custom_call.1} parent=1 // pred_check_branch
      %37 = sbr.rel (0) target = $region17
    $region16: #{tpu_custom_call.1} parent=1 // pred_region
      %s39 = ssub.s32 2048, 2048
      %40 = vsyncadd [#allocation9], %s39
      %s41 = sshll.u32 [#allocation8], 4
      %s42 = int_to_ptr.vmem [resolvable:$true] %s41
      %47 = dma.hbm_to_vmem [thread:$0]  %s3, 2048, %s42, [#allocation9], 64, 64, 4
    $region17: #{tpu_custom_call.1} parent=1 // pred_fallthru
      _
    // Predicated region
    $region18: #{tpu_custom_call.1} parent=1 // pred_check
      _
    $region19: #{tpu_custom_call.1} parent=1 // pred_check_branch
      %49 = sbr.rel (0) target = $region21
    $region20: #{tpu_custom_call.1} parent=1 // pred_region
      _
    $region21: #{tpu_custom_call.1} parent=1 // pred_fallthru
      _
    // Predicated region
    $region22: #{tpu_custom_call.1} parent=1 // pred_check
      _
    $region23: #{tpu_custom_call.1} parent=1 // pred_check_branch
      %51 = sbr.rel (0) target = $region25
    $region24: #{tpu_custom_call.1} parent=1 // pred_region
      %s53 = ssub.s32 3072, 3072
      %54 = vsyncadd [#allocation9], %s53
      %s55 = sshll.u32 [#allocation10], 4
      %s56 = int_to_ptr.vmem [resolvable:$true] %s55
      %61 = dma.hbm_to_vmem [thread:$0]  %s5, 3072, %s56, [#allocation9], 192, 192, 12
    $region25: #{tpu_custom_call.1} parent=1 // pred_fallthru
      _
    // Predicated region
    $region26: #{tpu_custom_call.1} parent=1 // pred_check
      _
    $region27: #{tpu_custom_call.1} parent=1 // pred_check_branch
      %63 = sbr.rel (0) target = $region29
    $region28: #{tpu_custom_call.1} parent=1 // pred_region
      _
    $region29: #{tpu_custom_call.1} parent=1 // pred_fallthru
      _
    // Predicated region
    $region30: #{tpu_custom_call.1} parent=1 // pred_check
      _
    $region31: #{tpu_custom_call.1} parent=1 // pred_check_branch
      %65 = sbr.rel (0) target = $region33
    $region32: #{tpu_custom_call.1} parent=1 // pred_region
      %s67 = ssub.s32 3072, 3072
      %68 = vsyncadd [#allocation12], %s67
      %s69 = sshll.u32 [#allocation11], 4
      %s70 = int_to_ptr.vmem [resolvable:$true] %s69
      %75 = dma.hbm_to_vmem [thread:$0]  %s7, 3072, %s70, [#allocation12], 192, 192, 12
    $region33: #{tpu_custom_call.1} parent=1 // pred_fallthru
      _
    // Predicated region
    $region34: #{tpu_custom_call.1} parent=1 // pred_check
      _
    $region35: #{tpu_custom_call.1} parent=1 // pred_check_branch
      %77 = sbr.rel (0) target = $region37
    $region36: #{tpu_custom_call.1} parent=1 // pred_region
      _
    $region37: #{tpu_custom_call.1} parent=1 // pred_fallthru
      _
    // Predicated region
    $region38: #{tpu_custom_call.1} parent=1 // pred_check
      _
    $region39: #{tpu_custom_call.1} parent=1 // pred_check_branch
      %79 = sbr.rel (0) target = $region41
    $region40: #{tpu_custom_call.1} parent=1 // pred_region
      _
    $region41: #{tpu_custom_call.1} parent=1 // pred_fallthru
      _
    // Predicated region
    $region42: #{tpu_custom_call.1} parent=1 // pred_check
      _
    $region43: #{tpu_custom_call.1} parent=1 // pred_check_branch
      %81 = sbr.rel (0) target = $region45
    $region44: #{tpu_custom_call.1} parent=1 // pred_region
      _
    $region45: #{tpu_custom_call.1} parent=1 // pred_fallthru
      _
    // Predicated region
    $region46: #{tpu_custom_call.1} parent=1 // pred_check
      _
    $region47: #{tpu_custom_call.1} parent=1 // pred_check_branch
      %83 = sbr.rel (0) target = $region49
    $region48: #{tpu_custom_call.1} parent=1 // pred_region
      %84 = dma.done [#allocation6], 512
    $region49: #{tpu_custom_call.1} parent=1 // pred_fallthru
      _
    // Predicated region
    $region50: #{tpu_custom_call.1} parent=1 // pred_check
      _
    $region51: #{tpu_custom_call.1} parent=1 // pred_check_branch
      %86 = sbr.rel (0) target = $region53
    $region52: #{tpu_custom_call.1} parent=1 // pred_region
      %87 = dma.done [#allocation9], 2048
    $region53: #{tpu_custom_call.1} parent=1 // pred_fallthru
      _
    // Predicated region
    $region54: #{tpu_custom_call.1} parent=1 // pred_check
      _
    $region55: #{tpu_custom_call.1} parent=1 // pred_check_branch
      %89 = sbr.rel (0) target = $region57
    $region56: #{tpu_custom_call.1} parent=1 // pred_region
      %90 = dma.done [#allocation9], 3072
    $region57: #{tpu_custom_call.1} parent=1 // pred_fallthru
      _
    // Predicated region
    $region58: #{tpu_custom_call.1} parent=1 // pred_check
      _
    $region59: #{tpu_custom_call.1} parent=1 // pred_check_branch
      %92 = sbr.rel (0) target = $region61
    $region60: #{tpu_custom_call.1} parent=1 // pred_region
      %93 = dma.done [#allocation12], 3072
    $region61: #{tpu_custom_call.1} parent=1 // pred_fallthru
      _
    %p95 = scmp.eq.s32.totalorder 0, 0
    // Predicated region
    $region62: #{tpu_custom_call.1} parent=1 // pred_check
      %p96 = pneg %p95
    $region63: #{tpu_custom_call.1} parent=1 // pred_check_branch
      %98 = sbr.rel (%p96) target = $region65
    $region64: #{tpu_custom_call.1} parent=1 // pred_region
      %99 = vst [vmem:[#allocation2] sm:$0xff] 0.0
      %100 = vst [vmem:[#allocation3] sm:$0xff] 0.0
    $region65: #{tpu_custom_call.1} parent=1 // pred_fallthru
      _
    %v101 = vld [vmem:[%s0] sm:$0xf]
    %v102 = vld [vmem:[%s0 + $0x4] sm:$0xf]
    %v103 = vld [vmem:[%s0 + $0x8] sm:$0xf]
    %v104 = vld [vmem:[%s0 + $0xc] sm:$0xf]
    %v105 = vld [vmem:[%s0 + $0x10] sm:$0xf]
    %v106 = vld [vmem:[%s0 + $0x14] sm:$0xf]
    %v107 = vld [vmem:[%s0 + $0x18] sm:$0xf]
    %v108 = vld [vmem:[%s0 + $0x1c] sm:$0xf]
    %v109 = vld [vmem:[#allocation5] sm:$0xff]
    %v110 = vld [vmem:[#allocation5 + $0x8] sm:$0xff]
    %v111 = vld [vmem:[#allocation5 + $0x10] sm:$0xff]
    %v112 = vld [vmem:[#allocation5 + $0x18] sm:$0xff]
    %v113 = vld [vmem:[%s2] sm:$0x3]
    %v115 = vlaneseq
    %v116 = vshrl.u32 %v115, 7
    %v117 = vsub.s32 0, %v116
    %v118 = vrot.slane %v113, %v117
    %v119 = vlaneseq
    %v120 = vshrl.u32 %v119, 7
    %v121 = vsub.s32 1, %v120
    %v122 = vrot.slane %v113, %v121
    %v133 = vunpack.c.l.b16 %v101
    %v134 = vunpack.c.l.b16 %v102
    %v135 = vunpack.c.l.b16 %v103
    %v136 = vunpack.c.l.b16 %v104
    %v137 = vunpack.c.l.b16 %v105
    %v138 = vunpack.c.l.b16 %v106
    %v139 = vunpack.c.l.b16 %v107
    %v140 = vunpack.c.l.b16 %v108
    %v141 = vpack.c.b16 %v134, %v133
    %v142 = vpack.c.b16 %v136, %v135
    %v143 = vpack.c.b16 %v138, %v137
    %v144 = vpack.c.b16 %v140, %v139
    %v149 = vunpack.c.l.b16 %v109
    %v150 = vunpack.c.h.b16 %v109
    %v151 = vunpack.c.l.b16 %v110
    %v152 = vunpack.c.h.b16 %v110
    %v153 = vunpack.c.l.b16 %v111
    %v154 = vunpack.c.h.b16 %v111
    %v155 = vunpack.c.l.b16 %v112
    %v156 = vunpack.c.h.b16 %v112
    %v157 = vpack.c.b16 %v151, %v149
    %v158 = vpack.c.b16 %v152, %v150
    %v159 = vpack.c.b16 %v155, %v153
    %v160 = vpack.c.b16 %v156, %v154
    %vm165 = vcmask 261120
    %v167 = vsel %vm165, %v141, 0
    %v170 = vsel %vm165, %v142, 0
    %v173 = vsel %vm165, %v143, 0
    %v176 = vsel %vm165, %v144, 0
    %178 = vmatprep.subr.bf16.mxu0 %v158
    %179 = vmatpush1.bf16.msra.mxu0 %v157
    %180 = vmatprep.subr.bf16.mxu0 %v160
    %181 = vmatpush1.bf16.msra.mxu0 %v159
    %182 = vmatprep.subr.bf16.mxu0 0
    %183 = vmatpush1.bf16.msra.mxu0 0
    %184 = vmatprep.subr.bf16.mxu0 0
    %185 = vmatpush1.bf16.msra.mxu0 0
    %186 = vmatprep.subr.bf16.mxu0 0
    %187 = vmatpush1.bf16.msra.mxu0 0
    %188 = vmatprep.subr.bf16.mxu0 0
    %189 = vmatpush1.bf16.msra.mxu0 0
    %190 = vmatprep.subr.bf16.mxu0 0
    %191 = vmatpush1.bf16.msra.mxu0 0
    %192 = vmatprep.subr.bf16.mxu0 0
    %193 = vmatpush1.bf16.msra.mxu0 0
    %194 = vmatprep.subr.bf16.mxu0 0
    %195 = vmatpush1.bf16.msra.mxu0 0
    %196 = vmatprep.subr.bf16.mxu0 0
    %197 = vmatpush1.bf16.msra.mxu0 0
    %198 = vmatprep.subr.bf16.mxu0 0
    %199 = vmatpush1.bf16.msra.mxu0 0
    %200 = vmatprep.subr.bf16.mxu0 0
    %201 = vmatpush1.bf16.msra.mxu0 0
    %202 = vmatprep.subr.bf16.mxu0 0
    %203 = vmatpush1.bf16.msra.mxu0 0
    %204 = vmatprep.subr.bf16.mxu0 0
    %205 = vmatpush1.bf16.msra.mxu0 0
    %206 = vmatprep.subr.bf16.mxu0 0
    %207 = vmatpush1.bf16.msra.mxu0 0
    %208 = vmatprep.subr.bf16.mxu0 0
    %209 = vmatpush1.bf16.msra.mxu0 0
    %210 = vmatprep.mubr.bf16.mxu0 0
    %211 = vmatmul.mubr.bf16.gmra.mrb[0].mxu0 %v167
    %v212 = vpop.f32.mrb[0].mxu0
    %v213 = vadd.f32 %v118, %v212
    %v214 = vpop.f32.mrb[0].mxu0
    %v215 = vadd.f32 %v122, %v214
    %v216 = vpop.f32.mrb[0].mxu0
    %v217 = vadd.f32 %v118, %v216
    %v218 = vpop.f32.mrb[0].mxu0
    %v219 = vadd.f32 %v122, %v218
    %220 = vmatprep.mubr.bf16.mxu0 0
    %221 = vmatmul.mubr.bf16.gmra.mrb[0].mxu0 %v170
    %v222 = vpop.f32.mrb[0].mxu0
    %v223 = vadd.f32 %v118, %v222
    %v224 = vpop.f32.mrb[0].mxu0
    %v225 = vadd.f32 %v122, %v224
    %v226 = vpop.f32.mrb[0].mxu0
    %v227 = vadd.f32 %v118, %v226
    %v228 = vpop.f32.mrb[0].mxu0
    %v229 = vadd.f32 %v122, %v228
    %230 = vmatprep.mubr.bf16.mxu0 0
    %231 = vmatmul.mubr.bf16.gmra.mrb[0].mxu0 %v173
    %v232 = vpop.f32.mrb[0].mxu0
    %v233 = vadd.f32 %v118, %v232
    %v234 = vpop.f32.mrb[0].mxu0
    %v235 = vadd.f32 %v122, %v234
    %v236 = vpop.f32.mrb[0].mxu0
    %v237 = vadd.f32 %v118, %v236
    %v238 = vpop.f32.mrb[0].mxu0
    %v239 = vadd.f32 %v122, %v238
    %240 = vmatprep.mubr.bf16.mxu0 0
    %241 = vmatmul.mubr.bf16.gmra.mrb[0].mxu0 %v176
    %v242 = vpop.f32.mrb[0].mxu0
    %v243 = vadd.f32 %v118, %v242
    %v244 = vpop.f32.mrb[0].mxu0
    %v245 = vadd.f32 %v122, %v244
    %v246 = vpop.f32.mrb[0].mxu0
    %v247 = vadd.f32 %v118, %v246
    %v248 = vpop.f32.mrb[0].mxu0
    %v249 = vadd.f32 %v122, %v248
    %250 = vdwg.mxu0
    %vm251 = vcmp.gt.f32.partialorder %v213, 1e-06
    %vm252 = vcmp.gt.f32.partialorder %v215, 1e-06
    %vm253 = vcmp.gt.f32.partialorder %v217, 1e-06
    %vm254 = vcmp.gt.f32.partialorder %v219, 1e-06
    %vm255 = vcmp.gt.f32.partialorder %v223, 1e-06
    %vm256 = vcmp.gt.f32.partialorder %v225, 1e-06
    %vm257 = vcmp.gt.f32.partialorder %v227, 1e-06
    %vm258 = vcmp.gt.f32.partialorder %v229, 1e-06
    %vm259 = vcmp.gt.f32.partialorder %v233, 1e-06
    %vm260 = vcmp.gt.f32.partialorder %v235, 1e-06
    %vm261 = vcmp.gt.f32.partialorder %v237, 1e-06
    %vm262 = vcmp.gt.f32.partialorder %v239, 1e-06
    %vm263 = vcmp.gt.f32.partialorder %v243, 1e-06
    %vm264 = vcmp.gt.f32.partialorder %v245, 1e-06
    %vm265 = vcmp.gt.f32.partialorder %v247, 1e-06
    %vm266 = vcmp.gt.f32.partialorder %v249, 1e-06
    %v267 = vsel %vm251, %v213, 0.0
    %v268 = vsel %vm252, %v215, 0.0
    %v269 = vsel %vm253, %v217, 0.0
    %v270 = vsel %vm254, %v219, 0.0
    %v271 = vsel %vm255, %v223, 0.0
    %v272 = vsel %vm256, %v225, 0.0
    %v273 = vsel %vm257, %v227, 0.0
    %v274 = vsel %vm258, %v229, 0.0
    %v275 = vsel %vm259, %v233, 0.0
    %v276 = vsel %vm260, %v235, 0.0
    %v277 = vsel %vm261, %v237, 0.0
    %v278 = vsel %vm262, %v239, 0.0
    %v279 = vsel %vm263, %v243, 0.0
    %v280 = vsel %vm264, %v245, 0.0
    %v281 = vsel %vm265, %v247, 0.0
    %v282 = vsel %vm266, %v249, 0.0
    %v283 = vpack.c.bf16 %v269, %v267
    %v284 = vpack.c.bf16 %v270, %v268
    %v285 = vpack.c.bf16 %v273, %v271
    %v286 = vpack.c.bf16 %v274, %v272
    %v287 = vpack.c.bf16 %v277, %v275
    %v288 = vpack.c.bf16 %v278, %v276
    %v289 = vpack.c.bf16 %v281, %v279
    %v290 = vpack.c.bf16 %v282, %v280
    %v291 = vld [vmem:[#allocation8] sm:$0xf]
    %v292 = vld [vmem:[#allocation8 + $0x4] sm:$0xf]
    %v293 = vld [vmem:[#allocation8 + $0x8] sm:$0xf]
    %v294 = vld [vmem:[#allocation8 + $0xc] sm:$0xf]
    %v295 = vld [vmem:[#allocation8 + $0x10] sm:$0xf]
    %v296 = vld [vmem:[#allocation8 + $0x14] sm:$0xf]
    %v297 = vld [vmem:[#allocation8 + $0x18] sm:$0xf]
    %v298 = vld [vmem:[#allocation8 + $0x1c] sm:$0xf]
    %v299 = vld [vmem:[#allocation8 + $0x20] sm:$0xf]
    %v300 = vld [vmem:[#allocation8 + $0x24] sm:$0xf]
    %v301 = vld [vmem:[#allocation8 + $0x28] sm:$0xf]
    %v302 = vld [vmem:[#allocation8 + $0x2c] sm:$0xf]
    %v303 = vld [vmem:[#allocation8 + $0x30] sm:$0xf]
    %v304 = vld [vmem:[#allocation8 + $0x34] sm:$0xf]
    %v305 = vld [vmem:[#allocation8 + $0x38] sm:$0xf]
    %v306 = vld [vmem:[#allocation8 + $0x3c] sm:$0xf]
    %v307 = vld [vmem:[#allocation8 + $0x40] sm:$0xf]
    %v308 = vld [vmem:[#allocation8 + $0x44] sm:$0xf]
    %v309 = vld [vmem:[#allocation8 + $0x48] sm:$0xf]
    %v310 = vld [vmem:[#allocation8 + $0x4c] sm:$0xf]
    %v311 = vld [vmem:[#allocation8 + $0x50] sm:$0xf]
    %v312 = vld [vmem:[#allocation8 + $0x54] sm:$0xf]
    %v313 = vld [vmem:[#allocation8 + $0x58] sm:$0xf]
    %v314 = vld [vmem:[#allocation8 + $0x5c] sm:$0xf]
    %v315 = vld [vmem:[#allocation8 + $0x60] sm:$0xf]
    %v316 = vld [vmem:[#allocation8 + $0x64] sm:$0xf]
    %v317 = vld [vmem:[#allocation8 + $0x68] sm:$0xf]
    %v318 = vld [vmem:[#allocation8 + $0x6c] sm:$0xf]
    %v319 = vld [vmem:[#allocation8 + $0x70] sm:$0xf]
    %v320 = vld [vmem:[#allocation8 + $0x74] sm:$0xf]
    %v321 = vld [vmem:[#allocation8 + $0x78] sm:$0xf]
    %v322 = vld [vmem:[#allocation8 + $0x7c] sm:$0xf]
    %v323 = vld [vmem:[%s4] sm:$0x1]
    %v325 = vlaneseq
    %v326 = vshrl.u32 %v325, 7
    %v327 = vsub.s32 0, %v326
    %v328 = vrot.slane %v323, %v327
    %v362 = vunpack.c.l.b16 %v291
    %v363 = vunpack.c.l.b16 %v292
    %v364 = vunpack.c.l.b16 %v293
    %v365 = vunpack.c.l.b16 %v294
    %v366 = vunpack.c.l.b16 %v295
    %v367 = vunpack.c.l.b16 %v296
    %v368 = vunpack.c.l.b16 %v297
    %v369 = vunpack.c.l.b16 %v298
    %v370 = vunpack.c.l.b16 %v299
    %v371 = vunpack.c.l.b16 %v300
    %v372 = vunpack.c.l.b16 %v301
    %v373 = vunpack.c.l.b16 %v302
    %v374 = vunpack.c.l.b16 %v303
    %v375 = vunpack.c.l.b16 %v304
    %v376 = vunpack.c.l.b16 %v305
    %v377 = vunpack.c.l.b16 %v306
    %v378 = vunpack.c.l.b16 %v307
    %v379 = vunpack.c.l.b16 %v308
    %v380 = vunpack.c.l.b16 %v309
    %v381 = vunpack.c.l.b16 %v310
    %v382 = vunpack.c.l.b16 %v311
    %v383 = vunpack.c.l.b16 %v312
    %v384 = vunpack.c.l.b16 %v313
    %v385 = vunpack.c.l.b16 %v314
    %v386 = vunpack.c.l.b16 %v315
    %v387 = vunpack.c.l.b16 %v316
    %v388 = vunpack.c.l.b16 %v317
    %v389 = vunpack.c.l.b16 %v318
    %v390 = vunpack.c.l.b16 %v319
    %v391 = vunpack.c.l.b16 %v320
    %v392 = vunpack.c.l.b16 %v321
    %v393 = vunpack.c.l.b16 %v322
    %v394 = vpack.c.b16 %v363, %v362
    %v395 = vpack.c.b16 %v365, %v364
    %v396 = vpack.c.b16 %v367, %v366
    %v397 = vpack.c.b16 %v369, %v368
    %v398 = vpack.c.b16 %v371, %v370
    %v399 = vpack.c.b16 %v373, %v372
    %v400 = vpack.c.b16 %v375, %v374
    %v401 = vpack.c.b16 %v377, %v376
    %v402 = vpack.c.b16 %v379, %v378
    %v403 = vpack.c.b16 %v381, %v380
    %v404 = vpack.c.b16 %v383, %v382
    %v405 = vpack.c.b16 %v385, %v384
    %v406 = vpack.c.b16 %v387, %v386
    %v407 = vpack.c.b16 %v389, %v388
    %v408 = vpack.c.b16 %v391, %v390
    %v409 = vpack.c.b16 %v393, %v392
    %426 = vmatprep.subr.bf16.mxu0 0
    %427 = vmatpush1.bf16.msra.mxu0 %v394
    %428 = vmatprep.subr.bf16.mxu0 0
    %429 = vmatpush1.bf16.msra.mxu0 %v395
    %430 = vmatprep.subr.bf16.mxu0 0
    %431 = vmatpush1.bf16.msra.mxu0 %v396
    %432 = vmatprep.subr.bf16.mxu0 0
    %433 = vmatpush1.bf16.msra.mxu0 %v397
    %434 = vmatprep.subr.bf16.mxu0 0
    %435 = vmatpush1.bf16.msra.mxu0 %v398
    %436 = vmatprep.subr.bf16.mxu0 0
    %437 = vmatpush1.bf16.msra.mxu0 %v399
    %438 = vmatprep.subr.bf16.mxu0 0
    %439 = vmatpush1.bf16.msra.mxu0 %v400
    %440 = vmatprep.subr.bf16.mxu0 0
    %441 = vmatpush1.bf16.msra.mxu0 %v401
    %442 = vmatprep.subr.bf16.mxu0 0
    %443 = vmatpush1.bf16.msra.mxu0 %v402
    %444 = vmatprep.subr.bf16.mxu0 0
    %445 = vmatpush1.bf16.msra.mxu0 %v403
    %446 = vmatprep.subr.bf16.mxu0 0
    %447 = vmatpush1.bf16.msra.mxu0 %v404
    %448 = vmatprep.subr.bf16.mxu0 0
    %449 = vmatpush1.bf16.msra.mxu0 %v405
    %450 = vmatprep.subr.bf16.mxu0 0
    %451 = vmatpush1.bf16.msra.mxu0 %v406
    %452 = vmatprep.subr.bf16.mxu0 0
    %453 = vmatpush1.bf16.msra.mxu0 %v407
    %454 = vmatprep.subr.bf16.mxu0 0
    %455 = vmatpush1.bf16.msra.mxu0 %v408
    %456 = vmatprep.subr.bf16.mxu0 0
    %457 = vmatpush1.bf16.msra.mxu0 %v409
    %458 = vmatprep.mubr.bf16.mxu0 %v284
    %459 = vmatmul.mubr.bf16.gmra.mrb[0].mxu0 %v283
    %v460 = vpop.f32.mrb[0].mxu0
    %v461 = vadd.f32 %v328, %v460
    %v462 = vpop.f32.mrb[0].mxu0
    %v463 = vpop.f32.mrb[0].mxu0
    %v464 = vadd.f32 %v328, %v463
    %v465 = vpop.f32.mrb[0].mxu0
    %466 = vmatprep.mubr.bf16.mxu0 %v286
    %467 = vmatmul.mubr.bf16.gmra.mrb[0].mxu0 %v285
    %v468 = vpop.f32.mrb[0].mxu0
    %v469 = vadd.f32 %v328, %v468
    %v470 = vpop.f32.mrb[0].mxu0
    %v471 = vpop.f32.mrb[0].mxu0
    %v472 = vadd.f32 %v328, %v471
    %v473 = vpop.f32.mrb[0].mxu0
    %474 = vmatprep.mubr.bf16.mxu0 %v288
    %475 = vmatmul.mubr.bf16.gmra.mrb[0].mxu0 %v287
    %v476 = vpop.f32.mrb[0].mxu0
    %v477 = vadd.f32 %v328, %v476
    %v478 = vpop.f32.mrb[0].mxu0
    %v479 = vpop.f32.mrb[0].mxu0
    %v480 = vadd.f32 %v328, %v479
    %v481 = vpop.f32.mrb[0].mxu0
    %482 = vmatprep.mubr.bf16.mxu0 %v290
    %483 = vmatmul.mubr.bf16.gmra.mrb[0].mxu0 %v289
    %v484 = vpop.f32.mrb[0].mxu0
    %v485 = vadd.f32 %v328, %v484
    %v486 = vpop.f32.mrb[0].mxu0
    %v487 = vpop.f32.mrb[0].mxu0
    %v488 = vadd.f32 %v328, %v487
    %v489 = vpop.f32.mrb[0].mxu0
    %490 = vdwg.mxu0
    %vm491 = vcmp.gt.f32.partialorder %v461, 1e-06
    %vm492 = vcmp.gt.f32.partialorder %v464, 1e-06
    %vm493 = vcmp.gt.f32.partialorder %v469, 1e-06
    %vm494 = vcmp.gt.f32.partialorder %v472, 1e-06
    %vm495 = vcmp.gt.f32.partialorder %v477, 1e-06
    %vm496 = vcmp.gt.f32.partialorder %v480, 1e-06
    %vm497 = vcmp.gt.f32.partialorder %v485, 1e-06
    %vm498 = vcmp.gt.f32.partialorder %v488, 1e-06
    %v499 = vsel %vm491, %v461, 0.0
    %v500 = vsel %vm492, %v464, 0.0
    %v501 = vsel %vm493, %v469, 0.0
    %v502 = vsel %vm494, %v472, 0.0
    %v503 = vsel %vm495, %v477, 0.0
    %v504 = vsel %vm496, %v480, 0.0
    %v505 = vsel %vm497, %v485, 0.0
    %v506 = vsel %vm498, %v488, 0.0
    %v507 = vpack.c.bf16 %v500, %v499
    %v508 = vpack.c.bf16 %v502, %v501
    %v509 = vpack.c.bf16 %v504, %v503
    %v510 = vpack.c.bf16 %v506, %v505
    %v511 = vld [vmem:[#allocation10] sm:$0xff]
    %v512 = vld [vmem:[#allocation10 + $0x8] sm:$0xf]
    %v513 = vld [vmem:[#allocation10 + $0xc] sm:$0xff]
    %v514 = vld [vmem:[#allocation10 + $0x14] sm:$0xf]
    %v515 = vld [vmem:[#allocation10 + $0x18] sm:$0xff]
    %v516 = vld [vmem:[#allocation10 + $0x20] sm:$0xf]
    %v517 = vld [vmem:[#allocation10 + $0x24] sm:$0xff]
    %v518 = vld [vmem:[#allocation10 + $0x2c] sm:$0xf]
    %v519 = vld [vmem:[#allocation10 + $0x30] sm:$0xff]
    %v520 = vld [vmem:[#allocation10 + $0x38] sm:$0xf]
    %v521 = vld [vmem:[#allocation10 + $0x3c] sm:$0xff]
    %v522 = vld [vmem:[#allocation10 + $0x44] sm:$0xf]
    %v523 = vld [vmem:[#allocation10 + $0x48] sm:$0xff]
    %v524 = vld [vmem:[#allocation10 + $0x50] sm:$0xf]
    %v525 = vld [vmem:[#allocation10 + $0x54] sm:$0xff]
    %v526 = vld [vmem:[#allocation10 + $0x5c] sm:$0xf]
    %v527 = vld [vmem:[#allocation10 + $0x60] sm:$0xff]
    %v528 = vld [vmem:[#allocation10 + $0x68] sm:$0xf]
    %v529 = vld [vmem:[#allocation10 + $0x6c] sm:$0xff]
    %v530 = vld [vmem:[#allocation10 + $0x74] sm:$0xf]
    %v531 = vld [vmem:[#allocation10 + $0x78] sm:$0xff]
    %v532 = vld [vmem:[#allocation10 + $0x80] sm:$0xf]
    %v533 = vld [vmem:[#allocation10 + $0x84] sm:$0xff]
    %v534 = vld [vmem:[#allocation10 + $0x8c] sm:$0xf]
    %v535 = vld [vmem:[#allocation10 + $0x90] sm:$0xff]
    %v536 = vld [vmem:[#allocation10 + $0x98] sm:$0xf]
    %v537 = vld [vmem:[#allocation10 + $0x9c] sm:$0xff]
    %v538 = vld [vmem:[#allocation10 + $0xa4] sm:$0xf]
    %v539 = vld [vmem:[#allocation10 + $0xa8] sm:$0xff]
    %v540 = vld [vmem:[#allocation10 + $0xb0] sm:$0xf]
    %v541 = vld [vmem:[#allocation10 + $0xb4] sm:$0xff]
    %v542 = vld [vmem:[#allocation10 + $0xbc] sm:$0xf]
    %v543 = vld [vmem:[%s6] sm:$0x7]
    %v545 = vlaneseq
    %v546 = vshrl.u32 %v545, 7
    %v547 = vsub.s32 0, %v546
    %v548 = vrot.slane %v543, %v547
    %v549 = vlaneseq
    %v550 = vshrl.u32 %v549, 7
    %v551 = vsub.s32 1, %v550
    %v552 = vrot.slane %v543, %v551
    %v553 = vlaneseq
    %v554 = vshrl.u32 %v553, 7
    %v555 = vsub.s32 2, %v554
    %v556 = vrot.slane %v543, %v555
    %v592 = vunpack.c.l.b16 %v511
    %v593 = vunpack.c.h.b16 %v511
    %v594 = vunpack.c.l.b16 %v512
    %v595 = vunpack.c.l.b16 %v513
    %v596 = vunpack.c.h.b16 %v513
    %v597 = vunpack.c.l.b16 %v514
    %v598 = vunpack.c.l.b16 %v515
    %v599 = vunpack.c.h.b16 %v515
    %v600 = vunpack.c.l.b16 %v516
    %v601 = vunpack.c.l.b16 %v517
    %v602 = vunpack.c.h.b16 %v517
    %v603 = vunpack.c.l.b16 %v518
    %v604 = vunpack.c.l.b16 %v519
    %v605 = vunpack.c.h.b16 %v519
    %v606 = vunpack.c.l.b16 %v520
    %v607 = vunpack.c.l.b16 %v521
    %v608 = vunpack.c.h.b16 %v521
    %v609 = vunpack.c.l.b16 %v522
    %v610 = vunpack.c.l.b16 %v523
    %v611 = vunpack.c.h.b16 %v523
    %v612 = vunpack.c.l.b16 %v524
    %v613 = vunpack.c.l.b16 %v525
    %v614 = vunpack.c.h.b16 %v525
    %v615 = vunpack.c.l.b16 %v526
    %v616 = vunpack.c.l.b16 %v527
    %v617 = vunpack.c.h.b16 %v527
    %v618 = vunpack.c.l.b16 %v528
    %v619 = vunpack.c.l.b16 %v529
    %v620 = vunpack.c.h.b16 %v529
    %v621 = vunpack.c.l.b16 %v530
    %v622 = vunpack.c.l.b16 %v531
    %v623 = vunpack.c.h.b16 %v531
    %v624 = vunpack.c.l.b16 %v532
    %v625 = vunpack.c.l.b16 %v533
    %v626 = vunpack.c.h.b16 %v533
    %v627 = vunpack.c.l.b16 %v534
    %v628 = vunpack.c.l.b16 %v535
    %v629 = vunpack.c.h.b16 %v535
    %v630 = vunpack.c.l.b16 %v536
    %v631 = vunpack.c.l.b16 %v537
    %v632 = vunpack.c.h.b16 %v537
    %v633 = vunpack.c.l.b16 %v538
    %v634 = vunpack.c.l.b16 %v539
    %v635 = vunpack.c.h.b16 %v539
    %v636 = vunpack.c.l.b16 %v540
    %v637 = vunpack.c.l.b16 %v541
    %v638 = vunpack.c.h.b16 %v541
    %v639 = vunpack.c.l.b16 %v542
    %v640 = vpack.c.b16 %v595, %v592
    %v641 = vpack.c.b16 %v596, %v593
    %v642 = vpack.c.b16 %v597, %v594
    %v643 = vpack.c.b16 %v601, %v598
    %v644 = vpack.c.b16 %v602, %v599
    %v645 = vpack.c.b16 %v603, %v600
    %v646 = vpack.c.b16 %v607, %v604
    %v647 = vpack.c.b16 %v608, %v605
    %v648 = vpack.c.b16 %v609, %v606
    %v649 = vpack.c.b16 %v613, %v610
    %v650 = vpack.c.b16 %v614, %v611
    %v651 = vpack.c.b16 %v615, %v612
    %v652 = vpack.c.b16 %v619, %v616
    %v653 = vpack.c.b16 %v620, %v617
    %v654 = vpack.c.b16 %v621, %v618
    %v655 = vpack.c.b16 %v625, %v622
    %v656 = vpack.c.b16 %v626, %v623
    %v657 = vpack.c.b16 %v627, %v624
    %v658 = vpack.c.b16 %v631, %v628
    %v659 = vpack.c.b16 %v632, %v629
    %v660 = vpack.c.b16 %v633, %v630
    %v661 = vpack.c.b16 %v637, %v634
    %v662 = vpack.c.b16 %v638, %v635
    %v663 = vpack.c.b16 %v639, %v636
    %688 = vmatprep.subr.bf16.mxu0 %v641
    %689 = vmatpush1.bf16.msra.mxu0 %v640
    %690 = vmatprep.subr.bf16.mxu0 %v644
    %691 = vmatpush1.bf16.msra.mxu0 %v643
    %692 = vmatprep.subr.bf16.mxu0 %v647
    %693 = vmatpush1.bf16.msra.mxu0 %v646
    %694 = vmatprep.subr.bf16.mxu0 %v650
    %695 = vmatpush1.bf16.msra.mxu0 %v649
    %696 = vmatprep.subr.bf16.mxu0 %v653
    %697 = vmatpush1.bf16.msra.mxu0 %v652
    %698 = vmatprep.subr.bf16.mxu0 %v656
    %699 = vmatpush1.bf16.msra.mxu0 %v655
    %700 = vmatprep.subr.bf16.mxu0 %v659
    %701 = vmatpush1.bf16.msra.mxu0 %v658
    %702 = vmatprep.subr.bf16.mxu0 %v662
    %703 = vmatpush1.bf16.msra.mxu0 %v661
    %704 = vmatprep.subr.bf16.mxu0 0
    %705 = vmatpush1.bf16.msra.mxu0 0
    %706 = vmatprep.subr.bf16.mxu0 0
    %707 = vmatpush1.bf16.msra.mxu0 0
    %708 = vmatprep.subr.bf16.mxu0 0
    %709 = vmatpush1.bf16.msra.mxu0 0
    %710 = vmatprep.subr.bf16.mxu0 0
    %711 = vmatpush1.bf16.msra.mxu0 0
    %712 = vmatprep.subr.bf16.mxu0 0
    %713 = vmatpush1.bf16.msra.mxu0 0
    %714 = vmatprep.subr.bf16.mxu0 0
    %715 = vmatpush1.bf16.msra.mxu0 0
    %716 = vmatprep.subr.bf16.mxu0 0
    %717 = vmatpush1.bf16.msra.mxu0 0
    %718 = vmatprep.subr.bf16.mxu0 0
    %719 = vmatpush1.bf16.msra.mxu0 0
    %720 = vmatprep.mubr.bf16.mxu0 0
    %721 = vmatmul.mubr.bf16.gmra.mrb[0].mxu0 %v507
    %v722 = vpop.f32.mrb[0].mxu0
    %v723 = vadd.f32 %v548, %v722
    %v724 = vpop.f32.mrb[0].mxu0
    %v725 = vadd.f32 %v552, %v724
    %v726 = vpop.f32.mrb[0].mxu0
    %v727 = vadd.f32 %v548, %v726
    %v728 = vpop.f32.mrb[0].mxu0
    %v729 = vadd.f32 %v552, %v728
    %730 = vmatprep.mubr.bf16.mxu0 0
    %731 = vmatmul.mubr.bf16.gmra.mrb[0].mxu0 %v508
    %v732 = vpop.f32.mrb[0].mxu0
    %v733 = vadd.f32 %v548, %v732
    %v734 = vpop.f32.mrb[0].mxu0
    %v735 = vadd.f32 %v552, %v734
    %v736 = vpop.f32.mrb[0].mxu0
    %v737 = vadd.f32 %v548, %v736
    %v738 = vpop.f32.mrb[0].mxu0
    %v739 = vadd.f32 %v552, %v738
    %740 = vmatprep.mubr.bf16.mxu0 0
    %741 = vmatmul.mubr.bf16.gmra.mrb[0].mxu0 %v509
    %v742 = vpop.f32.mrb[0].mxu0
    %v743 = vadd.f32 %v548, %v742
    %v744 = vpop.f32.mrb[0].mxu0
    %v745 = vadd.f32 %v552, %v744
    %v746 = vpop.f32.mrb[0].mxu0
    %v747 = vadd.f32 %v548, %v746
    %v748 = vpop.f32.mrb[0].mxu0
    %v749 = vadd.f32 %v552, %v748
    %750 = vmatprep.mubr.bf16.mxu0 0
    %751 = vmatmul.mubr.bf16.gmra.mrb[0].mxu0 %v510
    %v752 = vpop.f32.mrb[0].mxu0
    %v753 = vadd.f32 %v548, %v752
    %v754 = vpop.f32.mrb[0].mxu0
    %v755 = vadd.f32 %v552, %v754
    %v756 = vpop.f32.mrb[0].mxu0
    %v757 = vadd.f32 %v548, %v756
    %v758 = vpop.f32.mrb[0].mxu0
    %v759 = vadd.f32 %v552, %v758
    %760 = vdwg.mxu0
    %761 = vmatprep.subr.bf16.mxu0 0
    %762 = vmatpush1.bf16.msra.mxu0 %v642
    %763 = vmatprep.subr.bf16.mxu0 0
    %764 = vmatpush1.bf16.msra.mxu0 %v645
    %765 = vmatprep.subr.bf16.mxu0 0
    %766 = vmatpush1.bf16.msra.mxu0 %v648
    %767 = vmatprep.subr.bf16.mxu0 0
    %768 = vmatpush1.bf16.msra.mxu0 %v651
    %769 = vmatprep.subr.bf16.mxu0 0
    %770 = vmatpush1.bf16.msra.mxu0 %v654
    %771 = vmatprep.subr.bf16.mxu0 0
    %772 = vmatpush1.bf16.msra.mxu0 %v657
    %773 = vmatprep.subr.bf16.mxu0 0
    %774 = vmatpush1.bf16.msra.mxu0 %v660
    %775 = vmatprep.subr.bf16.mxu0 0
    %776 = vmatpush1.bf16.msra.mxu0 %v663
    %777 = vmatprep.subr.bf16.mxu0 0
    %778 = vmatpush1.bf16.msra.mxu0 0
    %779 = vmatprep.subr.bf16.mxu0 0
    %780 = vmatpush1.bf16.msra.mxu0 0
    %781 = vmatprep.subr.bf16.mxu0 0
    %782 = vmatpush1.bf16.msra.mxu0 0
    %783 = vmatprep.subr.bf16.mxu0 0
    %784 = vmatpush1.bf16.msra.mxu0 0
    %785 = vmatprep.subr.bf16.mxu0 0
    %786 = vmatpush1.bf16.msra.mxu0 0
    %787 = vmatprep.subr.bf16.mxu0 0
    %788 = vmatpush1.bf16.msra.mxu0 0
    %789 = vmatprep.subr.bf16.mxu0 0
    %790 = vmatpush1.bf16.msra.mxu0 0
    %791 = vmatprep.subr.bf16.mxu0 0
    %792 = vmatpush1.bf16.msra.mxu0 0
    %793 = vmatprep.mubr.bf16.mxu0 0
    %794 = vmatmul.mubr.bf16.gmra.mrb[0].mxu0 %v507
    %v795 = vpop.f32.mrb[0].mxu0
    %v796 = vadd.f32 %v556, %v795
    %v797 = vpop.f32.mrb[0].mxu0
    %v798 = vpop.f32.mrb[0].mxu0
    %v799 = vadd.f32 %v556, %v798
    %v800 = vpop.f32.mrb[0].mxu0
    %801 = vmatprep.mubr.bf16.mxu0 0
    %802 = vmatmul.mubr.bf16.gmra.mrb[0].mxu0 %v508
    %v803 = vpop.f32.mrb[0].mxu0
    %v804 = vadd.f32 %v556, %v803
    %v805 = vpop.f32.mrb[0].mxu0
    %v806 = vpop.f32.mrb[0].mxu0
    %v807 = vadd.f32 %v556, %v806
    %v808 = vpop.f32.mrb[0].mxu0
    %809 = vmatprep.mubr.bf16.mxu0 0
    %810 = vmatmul.mubr.bf16.gmra.mrb[0].mxu0 %v509
    %v811 = vpop.f32.mrb[0].mxu0
    %v812 = vadd.f32 %v556, %v811
    %v813 = vpop.f32.mrb[0].mxu0
    %v814 = vpop.f32.mrb[0].mxu0
    %v815 = vadd.f32 %v556, %v814
    %v816 = vpop.f32.mrb[0].mxu0
    %817 = vmatprep.mubr.bf16.mxu0 0
    %818 = vmatmul.mubr.bf16.gmra.mrb[0].mxu0 %v510
    %v819 = vpop.f32.mrb[0].mxu0
    %v820 = vadd.f32 %v556, %v819
    %v821 = vpop.f32.mrb[0].mxu0
    %v822 = vpop.f32.mrb[0].mxu0
    %v823 = vadd.f32 %v556, %v822
    %v824 = vpop.f32.mrb[0].mxu0
    %825 = vdwg.mxu0
    %826 = vst [vmem:[#allocation4] sm:$0xff] %v723
    %827 = vst [vmem:[#allocation4 + $0x8] sm:$0xff] %v725
    %828 = vst [vmem:[#allocation4 + $0x10] sm:$0xff] %v796
    %829 = vst [vmem:[#allocation4 + $0x18] sm:$0xff] %v727
    %830 = vst [vmem:[#allocation4 + $0x20] sm:$0xff] %v729
    %831 = vst [vmem:[#allocation4 + $0x28] sm:$0xff] %v799
    %832 = vst [vmem:[#allocation4 + $0x30] sm:$0xff] %v733
    %833 = vst [vmem:[#allocation4 + $0x38] sm:$0xff] %v735
    %834 = vst [vmem:[#allocation4 + $0x40] sm:$0xff] %v804
    %835 = vst [vmem:[#allocation4 + $0x48] sm:$0xff] %v737
    %836 = vst [vmem:[#allocation4 + $0x50] sm:$0xff] %v739
    %837 = vst [vmem:[#allocation4 + $0x58] sm:$0xff] %v807
    %838 = vst [vmem:[#allocation4 + $0x60] sm:$0xff] %v743
    %839 = vst [vmem:[#allocation4 + $0x68] sm:$0xff] %v745
    %840 = vst [vmem:[#allocation4 + $0x70] sm:$0xff] %v812
    %841 = vst [vmem:[#allocation4 + $0x78] sm:$0xff] %v747
    %842 = vst [vmem:[#allocation4 + $0x80] sm:$0xff] %v749
    %843 = vst [vmem:[#allocation4 + $0x88] sm:$0xff] %v815
    %844 = vst [vmem:[#allocation4 + $0x90] sm:$0xff] %v753
    %845 = vst [vmem:[#allocation4 + $0x98] sm:$0xff] %v755
    %846 = vst [vmem:[#allocation4 + $0xa0] sm:$0xff] %v820
    %847 = vst [vmem:[#allocation4 + $0xa8] sm:$0xff] %v757
    %848 = vst [vmem:[#allocation4 + $0xb0] sm:$0xff] %v759
    %849 = vst [vmem:[#allocation4 + $0xb8] sm:$0xff] %v823
    %v850 = vld [vmem:[#allocation11] sm:$0xff]
    %v851 = vld [vmem:[#allocation11 + $0x8] sm:$0xf]
    %v852 = vld [vmem:[#allocation11 + $0xc] sm:$0xff]
    %v853 = vld [vmem:[#allocation11 + $0x14] sm:$0xf]
    %v854 = vld [vmem:[#allocation11 + $0x18] sm:$0xff]
    %v855 = vld [vmem:[#allocation11 + $0x20] sm:$0xf]
    %v856 = vld [vmem:[#allocation11 + $0x24] sm:$0xff]
    %v857 = vld [vmem:[#allocation11 + $0x2c] sm:$0xf]
    %v858 = vld [vmem:[#allocation11 + $0x30] sm:$0xff]
    %v859 = vld [vmem:[#allocation11 + $0x38] sm:$0xf]
    %v860 = vld [vmem:[#allocation11 + $0x3c] sm:$0xff]
    %v861 = vld [vmem:[#allocation11 + $0x44] sm:$0xf]
    %v862 = vld [vmem:[#allocation11 + $0x48] sm:$0xff]
    %v863 = vld [vmem:[#allocation11 + $0x50] sm:$0xf]
    %v864 = vld [vmem:[#allocation11 + $0x54] sm:$0xff]
    %v865 = vld [vmem:[#allocation11 + $0x5c] sm:$0xf]
    %v866 = vld [vmem:[#allocation11 + $0x60] sm:$0xff]
    %v867 = vld [vmem:[#allocation11 + $0x68] sm:$0xf]
    %v868 = vld [vmem:[#allocation11 + $0x6c] sm:$0xff]
    %v869 = vld [vmem:[#allocation11 + $0x74] sm:$0xf]
    %v870 = vld [vmem:[#allocation11 + $0x78] sm:$0xff]
    %v871 = vld [vmem:[#allocation11 + $0x80] sm:$0xf]
    %v872 = vld [vmem:[#allocation11 + $0x84] sm:$0xff]
    %v873 = vld [vmem:[#allocation11 + $0x8c] sm:$0xf]
    %v874 = vld [vmem:[#allocation11 + $0x90] sm:$0xff]
    %v875 = vld [vmem:[#allocation11 + $0x98] sm:$0xf]
    %v876 = vld [vmem:[#allocation11 + $0x9c] sm:$0xff]
    %v877 = vld [vmem:[#allocation11 + $0xa4] sm:$0xf]
    %v878 = vld [vmem:[#allocation11 + $0xa8] sm:$0xff]
    %v879 = vld [vmem:[#allocation11 + $0xb0] sm:$0xf]
    %v880 = vld [vmem:[#allocation11 + $0xb4] sm:$0xff]
    %v881 = vld [vmem:[#allocation11 + $0xbc] sm:$0xf]
    %v882 = vld [vmem:[%s8] sm:$0x7]
    %v884 = vlaneseq
    %v885 = vshrl.u32 %v884, 7
    %v886 = vsub.s32 0, %v885
    %v887 = vrot.slane %v882, %v886
    %v888 = vlaneseq
    %v889 = vshrl.u32 %v888, 7
    %v890 = vsub.s32 1, %v889
    %v891 = vrot.slane %v882, %v890
    %v892 = vlaneseq
    %v893 = vshrl.u32 %v892, 7
    %v894 = vsub.s32 2, %v893
    %v895 = vrot.slane %v882, %v894
    %v899 = vld [vmem:[#allocation2] sm:$0xff]
    %v900 = vld [vmem:[#allocation3] sm:$0xff]
    %s901 = smul.u32 0, 3
    %s902 = smul.addr %s901, 8
    %s903 = scalar_lea.vmem [#allocation4], %s902
    %v904 = vld [vmem:[%s903] sm:$0xff]
    %v905 = vld [vmem:[%s903 + $0x8] sm:$0xff]
    %v906 = vld [vmem:[%s903 + $0x10] sm:$0xff]
    %v907 = vpack.c.bf16 %v899, %v899
    %v940 = vunpack.c.l.b16 %v850
    %v941 = vunpack.c.h.b16 %v850
    %v942 = vunpack.c.l.b16 %v851
    %v943 = vunpack.c.l.b16 %v852
    %v944 = vunpack.c.h.b16 %v852
    %v945 = vunpack.c.l.b16 %v853
    %v946 = vunpack.c.l.b16 %v854
    %v947 = vunpack.c.h.b16 %v854
    %v948 = vunpack.c.l.b16 %v855
    %v949 = vunpack.c.l.b16 %v856
    %v950 = vunpack.c.h.b16 %v856
    %v951 = vunpack.c.l.b16 %v857
    %v952 = vunpack.c.l.b16 %v858
    %v953 = vunpack.c.h.b16 %v858
    %v954 = vunpack.c.l.b16 %v859
    %v955 = vunpack.c.l.b16 %v860
    %v956 = vunpack.c.h.b16 %v860
    %v957 = vunpack.c.l.b16 %v861
    %v958 = vunpack.c.l.b16 %v862
    %v959 = vunpack.c.h.b16 %v862
    %v960 = vunpack.c.l.b16 %v863
    %v961 = vunpack.c.l.b16 %v864
    %v962 = vunpack.c.h.b16 %v864
    %v963 = vunpack.c.l.b16 %v865
    %v964 = vunpack.c.l.b16 %v866
    %v965 = vunpack.c.h.b16 %v866
    %v966 = vunpack.c.l.b16 %v867
    %v967 = vunpack.c.l.b16 %v868
    %v968 = vunpack.c.h.b16 %v868
    %v969 = vunpack.c.l.b16 %v869
    %v970 = vunpack.c.l.b16 %v870
    %v971 = vunpack.c.h.b16 %v870
    %v972 = vunpack.c.l.b16 %v871
    %v973 = vunpack.c.l.b16 %v872
    %v974 = vunpack.c.h.b16 %v872
    %v975 = vunpack.c.l.b16 %v873
    %v976 = vunpack.c.l.b16 %v874
    %v977 = vunpack.c.h.b16 %v874
    %v978 = vunpack.c.l.b16 %v875
    %v979 = vunpack.c.l.b16 %v876
    %v980 = vunpack.c.h.b16 %v876
    %v981 = vunpack.c.l.b16 %v877
    %v982 = vunpack.c.l.b16 %v878
    %v983 = vunpack.c.h.b16 %v878
    %v984 = vunpack.c.l.b16 %v879
    %v985 = vunpack.c.l.b16 %v880
    %v986 = vunpack.c.h.b16 %v880
    %v987 = vunpack.c.l.b16 %v881
    %v988 = vpack.c.b16 %v943, %v940
    %v989 = vpack.c.b16 %v944, %v941
    %v990 = vpack.c.b16 %v945, %v942
    %v991 = vpack.c.b16 %v949, %v946
    %v992 = vpack.c.b16 %v950, %v947
    %v993 = vpack.c.b16 %v951, %v948
    %v994 = vpack.c.b16 %v955, %v952
    %v995 = vpack.c.b16 %v956, %v953
    %v996 = vpack.c.b16 %v957, %v954
    %v997 = vpack.c.b16 %v961, %v958
    %v998 = vpack.c.b16 %v962, %v959
    %v999 = vpack.c.b16 %v963, %v960
    %v1000 = vpack.c.b16 %v967, %v964
    %v1001 = vpack.c.b16 %v968, %v965
    %v1002 = vpack.c.b16 %v969, %v966
    %v1003 = vpack.c.b16 %v973, %v970
    %v1004 = vpack.c.b16 %v974, %v971
    %v1005 = vpack.c.b16 %v975, %v972
    %v1006 = vpack.c.b16 %v979, %v976
    %v1007 = vpack.c.b16 %v980, %v977
    %v1008 = vpack.c.b16 %v981, %v978
    %v1009 = vpack.c.b16 %v985, %v982
    %v1010 = vpack.c.b16 %v986, %v983
    %v1011 = vpack.c.b16 %v987, %v984
    %1036 = vmatprep.subr.bf16.mxu0 %v989
    %1037 = vmatpush1.bf16.msra.mxu0 %v988
    %1038 = vmatprep.subr.bf16.mxu0 %v992
    %1039 = vmatpush1.bf16.msra.mxu0 %v991
    %1040 = vmatprep.subr.bf16.mxu0 %v995
    %1041 = vmatpush1.bf16.msra.mxu0 %v994
    %1042 = vmatprep.subr.bf16.mxu0 %v998
    %1043 = vmatpush1.bf16.msra.mxu0 %v997
    %1044 = vmatprep.subr.bf16.mxu0 %v1001
    %1045 = vmatpush1.bf16.msra.mxu0 %v1000
    %1046 = vmatprep.subr.bf16.mxu0 %v1004
    %1047 = vmatpush1.bf16.msra.mxu0 %v1003
    %1048 = vmatprep.subr.bf16.mxu0 %v1007
    %1049 = vmatpush1.bf16.msra.mxu0 %v1006
    %1050 = vmatprep.subr.bf16.mxu0 %v1010
    %1051 = vmatpush1.bf16.msra.mxu0 %v1009
    %1052 = vmatprep.subr.bf16.mxu0 0
    %1053 = vmatpush1.bf16.msra.mxu0 0
    %1054 = vmatprep.subr.bf16.mxu0 0
    %1055 = vmatpush1.bf16.msra.mxu0 0
    %1056 = vmatprep.subr.bf16.mxu0 0
    %1057 = vmatpush1.bf16.msra.mxu0 0
    %1058 = vmatprep.subr.bf16.mxu0 0
    %1059 = vmatpush1.bf16.msra.mxu0 0
    %1060 = vmatprep.subr.bf16.mxu0 0
    %1061 = vmatpush1.bf16.msra.mxu0 0
    %1062 = vmatprep.subr.bf16.mxu0 0
    %1063 = vmatpush1.bf16.msra.mxu0 0
    %1064 = vmatprep.subr.bf16.mxu0 0
    %1065 = vmatpush1.bf16.msra.mxu0 0
    %1066 = vmatprep.subr.bf16.mxu0 0
    %1067 = vmatpush1.bf16.msra.mxu0 0
    %1068 = vmatprep.mubr.bf16.mxu0 0
    %1069 = vmatmul.mubr.bf16.gmra.mrb[0].mxu0 %v907
    %v1070 = vpop.f32.mrb[0].mxu0
    %v1071 = vadd.f32 %v887, %v1070
    %v1072 = vpop.f32.mrb[0].mxu0
    %v1073 = vadd.f32 %v891, %v1072
    %v1074 = vpop.f32.mrb[0].mxu0
    %v1075 = vpop.f32.mrb[0].mxu0
    %1076 = vdwg.mxu0
    %1077 = vmatprep.subr.bf16.mxu0 0
    %1078 = vmatpush1.bf16.msra.mxu0 %v990
    %1079 = vmatprep.subr.bf16.mxu0 0
    %1080 = vmatpush1.bf16.msra.mxu0 %v993
    %1081 = vmatprep.subr.bf16.mxu0 0
    %1082 = vmatpush1.bf16.msra.mxu0 %v996
    %1083 = vmatprep.subr.bf16.mxu0 0
    %1084 = vmatpush1.bf16.msra.mxu0 %v999
    %1085 = vmatprep.subr.bf16.mxu0 0
    %1086 = vmatpush1.bf16.msra.mxu0 %v1002
    %1087 = vmatprep.subr.bf16.mxu0 0
    %1088 = vmatpush1.bf16.msra.mxu0 %v1005
    %1089 = vmatprep.subr.bf16.mxu0 0
    %1090 = vmatpush1.bf16.msra.mxu0 %v1008
    %1091 = vmatprep.subr.bf16.mxu0 0
    %1092 = vmatpush1.bf16.msra.mxu0 %v1011
    %1093 = vmatprep.subr.bf16.mxu0 0
    %1094 = vmatpush1.bf16.msra.mxu0 0
    %1095 = vmatprep.subr.bf16.mxu0 0
    %1096 = vmatpush1.bf16.msra.mxu0 0
    %1097 = vmatprep.subr.bf16.mxu0 0
    %1098 = vmatpush1.bf16.msra.mxu0 0
    %1099 = vmatprep.subr.bf16.mxu0 0
    %1100 = vmatpush1.bf16.msra.mxu0 0
    %1101 = vmatprep.subr.bf16.mxu0 0
    %1102 = vmatpush1.bf16.msra.mxu0 0
    %1103 = vmatprep.subr.bf16.mxu0 0
    %1104 = vmatpush1.bf16.msra.mxu0 0
    %1105 = vmatprep.subr.bf16.mxu0 0
    %1106 = vmatpush1.bf16.msra.mxu0 0
    %1107 = vmatprep.subr.bf16.mxu0 0
    %1108 = vmatpush1.bf16.msra.mxu0 0
    %1109 = vmatprep.mubr.bf16.mxu0 0
    %1110 = vmatmul.mubr.bf16.gmra.mrb[0].mxu0 %v907
    %v1111 = vpop.f32.mrb[0].mxu0
    %v1112 = vadd.f32 %v895, %v1111
    %v1113 = vpop.f32.mrb[0].mxu0
    %v1114 = vpop.f32.mrb[0].mxu0
    %v1115 = vpop.f32.mrb[0].mxu0
    %1116 = vdwg.mxu0
    %v1117 = vadd.f32 %v904, %v1071
    %v1118 = vxor.u32 %v1117, 2147483648
    %v1119 = vmul.f32 %v1118, 1.442695
    %v1120 = vpow.pop %v1119
    %v1121 = vadd.f32 %v1120, 1.0
    %v1122 = vrcp.pop %v1121
    %v1123 = vmul.f32 1.0, %v1122
    %v1124 = vadd.f32 %v905, %v1073
    %v1125 = vxor.u32 %v1124, 2147483648
    %v1126 = vmul.f32 %v1125, 1.442695
    %v1127 = vpow.pop %v1126
    %v1128 = vadd.f32 %v1127, 1.0
    %v1129 = vrcp.pop %v1128
    %v1130 = vmul.f32 1.0, %v1129
    %v1131 = vmul.f32 %v1123, %v1112
    %v1132 = vadd.f32 %v906, %v1131
    %v1133 = vtanh.pop %v1132
    %v1134 = vsub.f32 1.0, %v1130
    %v1135 = vmul.f32 %v1134, %v1133
    %v1136 = vmul.f32 %v1130, %v899
    %v1137 = vadd.f32 %v1135, %v1136
    %s1138 = smul.u32 0, 8
    %p1139 = scmp.lt.s32.totalorder %s1138, 8
    %s1140 = scalar_select %p1139, 1, 0
    %v1141 = vstv %s1140
    %vm1142 = vcmp.eq.s32.totalorder %v1141, 1
    %v1143 = vsel %vm1142, %v1137, %v899
    %v1144 = vsel %vm1142, %v1137, 0.0
    %v1145 = vadd.f32 %v900, %v1144
    %s1146 = smul.u32 1, 3
    %s1147 = smul.addr %s1146, 8
    %s1148 = scalar_lea.vmem [#allocation4], %s1147
    %v1149 = vld [vmem:[%s1148] sm:$0xff]
    %v1150 = vld [vmem:[%s1148 + $0x8] sm:$0xff]
    %v1151 = vld [vmem:[%s1148 + $0x10] sm:$0xff]
    %v1152 = vpack.c.bf16 %v1143, %v1143
    %1153 = vmatprep.subr.bf16.mxu0 %v989
    %1154 = vmatpush1.bf16.msra.mxu0 %v988
    %1155 = vmatprep.subr.bf16.mxu0 %v992
    %1156 = vmatpush1.bf16.msra.mxu0 %v991
    %1157 = vmatprep.subr.bf16.mxu0 %v995
    %1158 = vmatpush1.bf16.msra.mxu0 %v994
    %1159 = vmatprep.subr.bf16.mxu0 %v998
    %1160 = vmatpush1.bf16.msra.mxu0 %v997
    %1161 = vmatprep.subr.bf16.mxu0 %v1001
    %1162 = vmatpush1.bf16.msra.mxu0 %v1000
    %1163 = vmatprep.subr.bf16.mxu0 %v1004
    %1164 = vmatpush1.bf16.msra.mxu0 %v1003
    %1165 = vmatprep.subr.bf16.mxu0 %v1007
    %1166 = vmatpush1.bf16.msra.mxu0 %v1006
    %1167 = vmatprep.subr.bf16.mxu0 %v1010
    %1168 = vmatpush1.bf16.msra.mxu0 %v1009
    %1169 = vmatprep.subr.bf16.mxu0 0
    %1170 = vmatpush1.bf16.msra.mxu0 0
    %1171 = vmatprep.subr.bf16.mxu0 0
    %1172 = vmatpush1.bf16.msra.mxu0 0
    %1173 = vmatprep.subr.bf16.mxu0 0
    %1174 = vmatpush1.bf16.msra.mxu0 0
    %1175 = vmatprep.subr.bf16.mxu0 0
    %1176 = vmatpush1.bf16.msra.mxu0 0
    %1177 = vmatprep.subr.bf16.mxu0 0
    %1178 = vmatpush1.bf16.msra.mxu0 0
    %1179 = vmatprep.subr.bf16.mxu0 0
    %1180 = vmatpush1.bf16.msra.mxu0 0
    %1181 = vmatprep.subr.bf16.mxu0 0
    %1182 = vmatpush1.bf16.msra.mxu0 0
    %1183 = vmatprep.subr.bf16.mxu0 0
    %1184 = vmatpush1.bf16.msra.mxu0 0
    %1185 = vmatprep.mubr.bf16.mxu0 0
    %1186 = vmatmul.mubr.bf16.gmra.mrb[0].mxu0 %v1152
    %v1187 = vpop.f32.mrb[0].mxu0
    %v1188 = vadd.f32 %v887, %v1187
    %v1189 = vpop.f32.mrb[0].mxu0
    %v1190 = vadd.f32 %v891, %v1189
    %v1191 = vpop.f32.mrb[0].mxu0
    %v1192 = vpop.f32.mrb[0].mxu0
    %1193 = vdwg.mxu0
    %1194 = vmatprep.subr.bf16.mxu0 0
    %1195 = vmatpush1.bf16.msra.mxu0 %v990
    %1196 = vmatprep.subr.bf16.mxu0 0
    %1197 = vmatpush1.bf16.msra.mxu0 %v993
    %1198 = vmatprep.subr.bf16.mxu0 0
    %1199 = vmatpush1.bf16.msra.mxu0 %v996
    %1200 = vmatprep.subr.bf16.mxu0 0
    %1201 = vmatpush1.bf16.msra.mxu0 %v999
    %1202 = vmatprep.subr.bf16.mxu0 0
    %1203 = vmatpush1.bf16.msra.mxu0 %v1002
    %1204 = vmatprep.subr.bf16.mxu0 0
    %1205 = vmatpush1.bf16.msra.mxu0 %v1005
    %1206 = vmatprep.subr.bf16.mxu0 0
    %1207 = vmatpush1.bf16.msra.mxu0 %v1008
    %1208 = vmatprep.subr.bf16.mxu0 0
    %1209 = vmatpush1.bf16.msra.mxu0 %v1011
    %1210 = vmatprep.subr.bf16.mxu0 0
    %1211 = vmatpush1.bf16.msra.mxu0 0
    %1212 = vmatprep.subr.bf16.mxu0 0
    %1213 = vmatpush1.bf16.msra.mxu0 0
    %1214 = vmatprep.subr.bf16.mxu0 0
    %1215 = vmatpush1.bf16.msra.mxu0 0
    %1216 = vmatprep.subr.bf16.mxu0 0
    %1217 = vmatpush1.bf16.msra.mxu0 0
    %1218 = vmatprep.subr.bf16.mxu0 0
    %1219 = vmatpush1.bf16.msra.mxu0 0
    %1220 = vmatprep.subr.bf16.mxu0 0
    %1221 = vmatpush1.bf16.msra.mxu0 0
    %1222 = vmatprep.subr.bf16.mxu0 0
    %1223 = vmatpush1.bf16.msra.mxu0 0
    %1224 = vmatprep.subr.bf16.mxu0 0
    %1225 = vmatpush1.bf16.msra.mxu0 0
    %1226 = vmatprep.mubr.bf16.mxu0 0
    %1227 = vmatmul.mubr.bf16.gmra.mrb[0].mxu0 %v1152
    %v1228 = vpop.f32.mrb[0].mxu0
    %v1229 = vadd.f32 %v895, %v1228
    %v1230 = vpop.f32.mrb[0].mxu0
    %v1231 = vpop.f32.mrb[0].mxu0
    %v1232 = vpop.f32.mrb[0].mxu0
    %1233 = vdwg.mxu0
    %v1234 = vadd.f32 %v1149, %v1188
    %v1235 = vxor.u32 %v1234, 2147483648
    %v1236 = vmul.f32 %v1235, 1.442695
    %v1237 = vpow.pop %v1236
    %v1238 = vadd.f32 %v1237, 1.0
    %v1239 = vrcp.pop %v1238
    %v1240 = vmul.f32 1.0, %v1239
    %v1241 = vadd.f32 %v1150, %v1190
    %v1242 = vxor.u32 %v1241, 2147483648
    %v1243 = vmul.f32 %v1242, 1.442695
    %v1244 = vpow.pop %v1243
    %v1245 = vadd.f32 %v1244, 1.0
    %v1246 = vrcp.pop %v1245
    %v1247 = vmul.f32 1.0, %v1246
    %v1248 = vmul.f32 %v1240, %v1229
    %v1249 = vadd.f32 %v1151, %v1248
    %v1250 = vtanh.pop %v1249
    %v1251 = vsub.f32 1.0, %v1247
    %v1252 = vmul.f32 %v1251, %v1250
    %v1253 = vmul.f32 %v1247, %v1143
    %v1254 = vadd.f32 %v1252, %v1253
    %s1255 = sadd.s32 %s1138, 1
    %p1256 = scmp.lt.s32.totalorder %s1255, 8
    %s1257 = scalar_select %p1256, 1, 0
    %v1258 = vstv %s1257
    %vm1259 = vcmp.eq.s32.totalorder %v1258, 1
    %v1260 = vsel %vm1259, %v1254, %v1143
    %v1261 = vsel %vm1259, %v1254, 0.0
    %v1262 = vadd.f32 %v1145, %v1261
    %s1263 = smul.u32 2, 3
    %s1264 = smul.addr %s1263, 8
    %s1265 = scalar_lea.vmem [#allocation4], %s1264
    %v1266 = vld [vmem:[%s1265] sm:$0xff]
    %v1267 = vld [vmem:[%s1265 + $0x8] sm:$0xff]
    %v1268 = vld [vmem:[%s1265 + $0x10] sm:$0xff]
    %v1269 = vpack.c.bf16 %v1260, %v1260
    %1270 = vmatprep.subr.bf16.mxu0 %v989
    %1271 = vmatpush1.bf16.msra.mxu0 %v988
    %1272 = vmatprep.subr.bf16.mxu0 %v992
    %1273 = vmatpush1.bf16.msra.mxu0 %v991
    %1274 = vmatprep.subr.bf16.mxu0 %v995
    %1275 = vmatpush1.bf16.msra.mxu0 %v994
    %1276 = vmatprep.subr.bf16.mxu0 %v998
    %1277 = vmatpush1.bf16.msra.mxu0 %v997
    %1278 = vmatprep.subr.bf16.mxu0 %v1001
    %1279 = vmatpush1.bf16.msra.mxu0 %v1000
    %1280 = vmatprep.subr.bf16.mxu0 %v1004
    %1281 = vmatpush1.bf16.msra.mxu0 %v1003
    %1282 = vmatprep.subr.bf16.mxu0 %v1007
    %1283 = vmatpush1.bf16.msra.mxu0 %v1006
    %1284 = vmatprep.subr.bf16.mxu0 %v1010
    %1285 = vmatpush1.bf16.msra.mxu0 %v1009
    %1286 = vmatprep.subr.bf16.mxu0 0
    %1287 = vmatpush1.bf16.msra.mxu0 0
    %1288 = vmatprep.subr.bf16.mxu0 0
    %1289 = vmatpush1.bf16.msra.mxu0 0
    %1290 = vmatprep.subr.bf16.mxu0 0
    %1291 = vmatpush1.bf16.msra.mxu0 0
    %1292 = vmatprep.subr.bf16.mxu0 0
    %1293 = vmatpush1.bf16.msra.mxu0 0
    %1294 = vmatprep.subr.bf16.mxu0 0
    %1295 = vmatpush1.bf16.msra.mxu0 0
    %1296 = vmatprep.subr.bf16.mxu0 0
    %1297 = vmatpush1.bf16.msra.mxu0 0
    %1298 = vmatprep.subr.bf16.mxu0 0
    %1299 = vmatpush1.bf16.msra.mxu0 0
    %1300 = vmatprep.subr.bf16.mxu0 0
    %1301 = vmatpush1.bf16.msra.mxu0 0
    %1302 = vmatprep.mubr.bf16.mxu0 0
    %1303 = vmatmul.mubr.bf16.gmra.mrb[0].mxu0 %v1269
    %v1304 = vpop.f32.mrb[0].mxu0
    %v1305 = vadd.f32 %v887, %v1304
    %v1306 = vpop.f32.mrb[0].mxu0
    %v1307 = vadd.f32 %v891, %v1306
    %v1308 = vpop.f32.mrb[0].mxu0
    %v1309 = vpop.f32.mrb[0].mxu0
    %1310 = vdwg.mxu0
    %1311 = vmatprep.subr.bf16.mxu0 0
    %1312 = vmatpush1.bf16.msra.mxu0 %v990
    %1313 = vmatprep.subr.bf16.mxu0 0
    %1314 = vmatpush1.bf16.msra.mxu0 %v993
    %1315 = vmatprep.subr.bf16.mxu0 0
    %1316 = vmatpush1.bf16.msra.mxu0 %v996
    %1317 = vmatprep.subr.bf16.mxu0 0
    %1318 = vmatpush1.bf16.msra.mxu0 %v999
    %1319 = vmatprep.subr.bf16.mxu0 0
    %1320 = vmatpush1.bf16.msra.mxu0 %v1002
    %1321 = vmatprep.subr.bf16.mxu0 0
    %1322 = vmatpush1.bf16.msra.mxu0 %v1005
    %1323 = vmatprep.subr.bf16.mxu0 0
    %1324 = vmatpush1.bf16.msra.mxu0 %v1008
    %1325 = vmatprep.subr.bf16.mxu0 0
    %1326 = vmatpush1.bf16.msra.mxu0 %v1011
    %1327 = vmatprep.subr.bf16.mxu0 0
    %1328 = vmatpush1.bf16.msra.mxu0 0
    %1329 = vmatprep.subr.bf16.mxu0 0
    %1330 = vmatpush1.bf16.msra.mxu0 0
    %1331 = vmatprep.subr.bf16.mxu0 0
    %1332 = vmatpush1.bf16.msra.mxu0 0
    %1333 = vmatprep.subr.bf16.mxu0 0
    %1334 = vmatpush1.bf16.msra.mxu0 0
    %1335 = vmatprep.subr.bf16.mxu0 0
    %1336 = vmatpush1.bf16.msra.mxu0 0
    %1337 = vmatprep.subr.bf16.mxu0 0
    %1338 = vmatpush1.bf16.msra.mxu0 0
    %1339 = vmatprep.subr.bf16.mxu0 0
    %1340 = vmatpush1.bf16.msra.mxu0 0
    %1341 = vmatprep.subr.bf16.mxu0 0
    %1342 = vmatpush1.bf16.msra.mxu0 0
    %1343 = vmatprep.mubr.bf16.mxu0 0
    %1344 = vmatmul.mubr.bf16.gmra.mrb[0].mxu0 %v1269
    %v1345 = vpop.f32.mrb[0].mxu0
    %v1346 = vadd.f32 %v895, %v1345
    %v1347 = vpop.f32.mrb[0].mxu0
    %v1348 = vpop.f32.mrb[0].mxu0
    %v1349 = vpop.f32.mrb[0].mxu0
    %1350 = vdwg.mxu0
    %v1351 = vadd.f32 %v1266, %v1305
    %v1352 = vxor.u32 %v1351, 2147483648
    %v1353 = vmul.f32 %v1352, 1.442695
    %v1354 = vpow.pop %v1353
    %v1355 = vadd.f32 %v1354, 1.0
    %v1356 = vrcp.pop %v1355
    %v1357 = vmul.f32 1.0, %v1356
    %v1358 = vadd.f32 %v1267, %v1307
    %v1359 = vxor.u32 %v1358, 2147483648
    %v1360 = vmul.f32 %v1359, 1.442695
    %v1361 = vpow.pop %v1360
    %v1362 = vadd.f32 %v1361, 1.0
    %v1363 = vrcp.pop %v1362
    %v1364 = vmul.f32 1.0, %v1363
    %v1365 = vmul.f32 %v1357, %v1346
    %v1366 = vadd.f32 %v1268, %v1365
    %v1367 = vtanh.pop %v1366
    %v1368 = vsub.f32 1.0, %v1364
    %v1369 = vmul.f32 %v1368, %v1367
    %v1370 = vmul.f32 %v1364, %v1260
    %v1371 = vadd.f32 %v1369, %v1370
    %s1372 = sadd.s32 %s1138, 2
    %p1373 = scmp.lt.s32.totalorder %s1372, 8
    %s1374 = scalar_select %p1373, 1, 0
    %v1375 = vstv %s1374
    %vm1376 = vcmp.eq.s32.totalorder %v1375, 1
    %v1377 = vsel %vm1376, %v1371, %v1260
    %v1378 = vsel %vm1376, %v1371, 0.0
    %v1379 = vadd.f32 %v1262, %v1378
    %s1380 = smul.u32 3, 3
    %s1381 = smul.addr %s1380, 8
    %s1382 = scalar_lea.vmem [#allocation4], %s1381
    %v1383 = vld [vmem:[%s1382] sm:$0xff]
    %v1384 = vld [vmem:[%s1382 + $0x8] sm:$0xff]
    %v1385 = vld [vmem:[%s1382 + $0x10] sm:$0xff]
    %v1386 = vpack.c.bf16 %v1377, %v1377
    %1387 = vmatprep.subr.bf16.mxu0 %v989
    %1388 = vmatpush1.bf16.msra.mxu0 %v988
    %1389 = vmatprep.subr.bf16.mxu0 %v992
    %1390 = vmatpush1.bf16.msra.mxu0 %v991
    %1391 = vmatprep.subr.bf16.mxu0 %v995
    %1392 = vmatpush1.bf16.msra.mxu0 %v994
    %1393 = vmatprep.subr.bf16.mxu0 %v998
    %1394 = vmatpush1.bf16.msra.mxu0 %v997
    %1395 = vmatprep.subr.bf16.mxu0 %v1001
    %1396 = vmatpush1.bf16.msra.mxu0 %v1000
    %1397 = vmatprep.subr.bf16.mxu0 %v1004
    %1398 = vmatpush1.bf16.msra.mxu0 %v1003
    %1399 = vmatprep.subr.bf16.mxu0 %v1007
    %1400 = vmatpush1.bf16.msra.mxu0 %v1006
    %1401 = vmatprep.subr.bf16.mxu0 %v1010
    %1402 = vmatpush1.bf16.msra.mxu0 %v1009
    %1403 = vmatprep.subr.bf16.mxu0 0
    %1404 = vmatpush1.bf16.msra.mxu0 0
    %1405 = vmatprep.subr.bf16.mxu0 0
    %1406 = vmatpush1.bf16.msra.mxu0 0
    %1407 = vmatprep.subr.bf16.mxu0 0
    %1408 = vmatpush1.bf16.msra.mxu0 0
    %1409 = vmatprep.subr.bf16.mxu0 0
    %1410 = vmatpush1.bf16.msra.mxu0 0
    %1411 = vmatprep.subr.bf16.mxu0 0
    %1412 = vmatpush1.bf16.msra.mxu0 0
    %1413 = vmatprep.subr.bf16.mxu0 0
    %1414 = vmatpush1.bf16.msra.mxu0 0
    %1415 = vmatprep.subr.bf16.mxu0 0
    %1416 = vmatpush1.bf16.msra.mxu0 0
    %1417 = vmatprep.subr.bf16.mxu0 0
    %1418 = vmatpush1.bf16.msra.mxu0 0
    %1419 = vmatprep.mubr.bf16.mxu0 0
    %1420 = vmatmul.mubr.bf16.gmra.mrb[0].mxu0 %v1386
    %v1421 = vpop.f32.mrb[0].mxu0
    %v1422 = vadd.f32 %v887, %v1421
    %v1423 = vpop.f32.mrb[0].mxu0
    %v1424 = vadd.f32 %v891, %v1423
    %v1425 = vpop.f32.mrb[0].mxu0
    %v1426 = vpop.f32.mrb[0].mxu0
    %1427 = vdwg.mxu0
    %1428 = vmatprep.subr.bf16.mxu0 0
    %1429 = vmatpush1.bf16.msra.mxu0 %v990
    %1430 = vmatprep.subr.bf16.mxu0 0
    %1431 = vmatpush1.bf16.msra.mxu0 %v993
    %1432 = vmatprep.subr.bf16.mxu0 0
    %1433 = vmatpush1.bf16.msra.mxu0 %v996
    %1434 = vmatprep.subr.bf16.mxu0 0
    %1435 = vmatpush1.bf16.msra.mxu0 %v999
    %1436 = vmatprep.subr.bf16.mxu0 0
    %1437 = vmatpush1.bf16.msra.mxu0 %v1002
    %1438 = vmatprep.subr.bf16.mxu0 0
    %1439 = vmatpush1.bf16.msra.mxu0 %v1005
    %1440 = vmatprep.subr.bf16.mxu0 0
    %1441 = vmatpush1.bf16.msra.mxu0 %v1008
    %1442 = vmatprep.subr.bf16.mxu0 0
    %1443 = vmatpush1.bf16.msra.mxu0 %v1011
    %1444 = vmatprep.subr.bf16.mxu0 0
    %1445 = vmatpush1.bf16.msra.mxu0 0
    %1446 = vmatprep.subr.bf16.mxu0 0
    %1447 = vmatpush1.bf16.msra.mxu0 0
    %1448 = vmatprep.subr.bf16.mxu0 0
    %1449 = vmatpush1.bf16.msra.mxu0 0
    %1450 = vmatprep.subr.bf16.mxu0 0
    %1451 = vmatpush1.bf16.msra.mxu0 0
    %1452 = vmatprep.subr.bf16.mxu0 0
    %1453 = vmatpush1.bf16.msra.mxu0 0
    %1454 = vmatprep.subr.bf16.mxu0 0
    %1455 = vmatpush1.bf16.msra.mxu0 0
    %1456 = vmatprep.subr.bf16.mxu0 0
    %1457 = vmatpush1.bf16.msra.mxu0 0
    %1458 = vmatprep.subr.bf16.mxu0 0
    %1459 = vmatpush1.bf16.msra.mxu0 0
    %1460 = vmatprep.mubr.bf16.mxu0 0
    %1461 = vmatmul.mubr.bf16.gmra.mrb[0].mxu0 %v1386
    %v1462 = vpop.f32.mrb[0].mxu0
    %v1463 = vadd.f32 %v895, %v1462
    %v1464 = vpop.f32.mrb[0].mxu0
    %v1465 = vpop.f32.mrb[0].mxu0
    %v1466 = vpop.f32.mrb[0].mxu0
    %1467 = vdwg.mxu0
    %v1468 = vadd.f32 %v1383, %v1422
    %v1469 = vxor.u32 %v1468, 2147483648
    %v1470 = vmul.f32 %v1469, 1.442695
    %v1471 = vpow.pop %v1470
    %v1472 = vadd.f32 %v1471, 1.0
    %v1473 = vrcp.pop %v1472
    %v1474 = vmul.f32 1.0, %v1473
    %v1475 = vadd.f32 %v1384, %v1424
    %v1476 = vxor.u32 %v1475, 2147483648
    %v1477 = vmul.f32 %v1476, 1.442695
    %v1478 = vpow.pop %v1477
    %v1479 = vadd.f32 %v1478, 1.0
    %v1480 = vrcp.pop %v1479
    %v1481 = vmul.f32 1.0, %v1480
    %v1482 = vmul.f32 %v1474, %v1463
    %v1483 = vadd.f32 %v1385, %v1482
    %v1484 = vtanh.pop %v1483
    %v1485 = vsub.f32 1.0, %v1481
    %v1486 = vmul.f32 %v1485, %v1484
    %v1487 = vmul.f32 %v1481, %v1377
    %v1488 = vadd.f32 %v1486, %v1487
    %s1489 = sadd.s32 %s1138, 3
    %p1490 = scmp.lt.s32.totalorder %s1489, 8
    %s1491 = scalar_select %p1490, 1, 0
    %v1492 = vstv %s1491
    %vm1493 = vcmp.eq.s32.totalorder %v1492, 1
    %v1494 = vsel %vm1493, %v1488, %v1377
    %v1495 = vsel %vm1493, %v1488, 0.0
    %v1496 = vadd.f32 %v1379, %v1495
    %s1497 = smul.u32 4, 3
    %s1498 = smul.addr %s1497, 8
    %s1499 = scalar_lea.vmem [#allocation4], %s1498
    %v1500 = vld [vmem:[%s1499] sm:$0xff]
    %v1501 = vld [vmem:[%s1499 + $0x8] sm:$0xff]
    %v1502 = vld [vmem:[%s1499 + $0x10] sm:$0xff]
    %v1503 = vpack.c.bf16 %v1494, %v1494
    %1504 = vmatprep.subr.bf16.mxu0 %v989
    %1505 = vmatpush1.bf16.msra.mxu0 %v988
    %1506 = vmatprep.subr.bf16.mxu0 %v992
    %1507 = vmatpush1.bf16.msra.mxu0 %v991
    %1508 = vmatprep.subr.bf16.mxu0 %v995
    %1509 = vmatpush1.bf16.msra.mxu0 %v994
    %1510 = vmatprep.subr.bf16.mxu0 %v998
    %1511 = vmatpush1.bf16.msra.mxu0 %v997
    %1512 = vmatprep.subr.bf16.mxu0 %v1001
    %1513 = vmatpush1.bf16.msra.mxu0 %v1000
    %1514 = vmatprep.subr.bf16.mxu0 %v1004
    %1515 = vmatpush1.bf16.msra.mxu0 %v1003
    %1516 = vmatprep.subr.bf16.mxu0 %v1007
    %1517 = vmatpush1.bf16.msra.mxu0 %v1006
    %1518 = vmatprep.subr.bf16.mxu0 %v1010
    %1519 = vmatpush1.bf16.msra.mxu0 %v1009
    %1520 = vmatprep.subr.bf16.mxu0 0
    %1521 = vmatpush1.bf16.msra.mxu0 0
    %1522 = vmatprep.subr.bf16.mxu0 0
    %1523 = vmatpush1.bf16.msra.mxu0 0
    %1524 = vmatprep.subr.bf16.mxu0 0
    %1525 = vmatpush1.bf16.msra.mxu0 0
    %1526 = vmatprep.subr.bf16.mxu0 0
    %1527 = vmatpush1.bf16.msra.mxu0 0
    %1528 = vmatprep.subr.bf16.mxu0 0
    %1529 = vmatpush1.bf16.msra.mxu0 0
    %1530 = vmatprep.subr.bf16.mxu0 0
    %1531 = vmatpush1.bf16.msra.mxu0 0
    %1532 = vmatprep.subr.bf16.mxu0 0
    %1533 = vmatpush1.bf16.msra.mxu0 0
    %1534 = vmatprep.subr.bf16.mxu0 0
    %1535 = vmatpush1.bf16.msra.mxu0 0
    %1536 = vmatprep.mubr.bf16.mxu0 0
    %1537 = vmatmul.mubr.bf16.gmra.mrb[0].mxu0 %v1503
    %v1538 = vpop.f32.mrb[0].mxu0
    %v1539 = vadd.f32 %v887, %v1538
    %v1540 = vpop.f32.mrb[0].mxu0
    %v1541 = vadd.f32 %v891, %v1540
    %v1542 = vpop.f32.mrb[0].mxu0
    %v1543 = vpop.f32.mrb[0].mxu0
    %1544 = vdwg.mxu0
    %1545 = vmatprep.subr.bf16.mxu0 0
    %1546 = vmatpush1.bf16.msra.mxu0 %v990
    %1547 = vmatprep.subr.bf16.mxu0 0
    %1548 = vmatpush1.bf16.msra.mxu0 %v993
    %1549 = vmatprep.subr.bf16.mxu0 0
    %1550 = vmatpush1.bf16.msra.mxu0 %v996
    %1551 = vmatprep.subr.bf16.mxu0 0
    %1552 = vmatpush1.bf16.msra.mxu0 %v999
    %1553 = vmatprep.subr.bf16.mxu0 0
    %1554 = vmatpush1.bf16.msra.mxu0 %v1002
    %1555 = vmatprep.subr.bf16.mxu0 0
    %1556 = vmatpush1.bf16.msra.mxu0 %v1005
    %1557 = vmatprep.subr.bf16.mxu0 0
    %1558 = vmatpush1.bf16.msra.mxu0 %v1008
    %1559 = vmatprep.subr.bf16.mxu0 0
    %1560 = vmatpush1.bf16.msra.mxu0 %v1011
    %1561 = vmatprep.subr.bf16.mxu0 0
    %1562 = vmatpush1.bf16.msra.mxu0 0
    %1563 = vmatprep.subr.bf16.mxu0 0
    %1564 = vmatpush1.bf16.msra.mxu0 0
    %1565 = vmatprep.subr.bf16.mxu0 0
    %1566 = vmatpush1.bf16.msra.mxu0 0
    %1567 = vmatprep.subr.bf16.mxu0 0
    %1568 = vmatpush1.bf16.msra.mxu0 0
    %1569 = vmatprep.subr.bf16.mxu0 0
    %1570 = vmatpush1.bf16.msra.mxu0 0
    %1571 = vmatprep.subr.bf16.mxu0 0
    %1572 = vmatpush1.bf16.msra.mxu0 0
    %1573 = vmatprep.subr.bf16.mxu0 0
    %1574 = vmatpush1.bf16.msra.mxu0 0
    %1575 = vmatprep.subr.bf16.mxu0 0
    %1576 = vmatpush1.bf16.msra.mxu0 0
    %1577 = vmatprep.mubr.bf16.mxu0 0
    %1578 = vmatmul.mubr.bf16.gmra.mrb[0].mxu0 %v1503
    %v1579 = vpop.f32.mrb[0].mxu0
    %v1580 = vadd.f32 %v895, %v1579
    %v1581 = vpop.f32.mrb[0].mxu0
    %v1582 = vpop.f32.mrb[0].mxu0
    %v1583 = vpop.f32.mrb[0].mxu0
    %1584 = vdwg.mxu0
    %v1585 = vadd.f32 %v1500, %v1539
    %v1586 = vxor.u32 %v1585, 2147483648
    %v1587 = vmul.f32 %v1586, 1.442695
    %v1588 = vpow.pop %v1587
    %v1589 = vadd.f32 %v1588, 1.0
    %v1590 = vrcp.pop %v1589
    %v1591 = vmul.f32 1.0, %v1590
    %v1592 = vadd.f32 %v1501, %v1541
    %v1593 = vxor.u32 %v1592, 2147483648
    %v1594 = vmul.f32 %v1593, 1.442695
    %v1595 = vpow.pop %v1594
    %v1596 = vadd.f32 %v1595, 1.0
    %v1597 = vrcp.pop %v1596
    %v1598 = vmul.f32 1.0, %v1597
    %v1599 = vmul.f32 %v1591, %v1580
    %v1600 = vadd.f32 %v1502, %v1599
    %v1601 = vtanh.pop %v1600
    %v1602 = vsub.f32 1.0, %v1598
    %v1603 = vmul.f32 %v1602, %v1601
    %v1604 = vmul.f32 %v1598, %v1494
    %v1605 = vadd.f32 %v1603, %v1604
    %s1606 = sadd.s32 %s1138, 4
    %p1607 = scmp.lt.s32.totalorder %s1606, 8
    %s1608 = scalar_select %p1607, 1, 0
    %v1609 = vstv %s1608
    %vm1610 = vcmp.eq.s32.totalorder %v1609, 1
    %v1611 = vsel %vm1610, %v1605, %v1494
    %v1612 = vsel %vm1610, %v1605, 0.0
    %v1613 = vadd.f32 %v1496, %v1612
    %s1614 = smul.u32 5, 3
    %s1615 = smul.addr %s1614, 8
    %s1616 = scalar_lea.vmem [#allocation4], %s1615
    %v1617 = vld [vmem:[%s1616] sm:$0xff]
    %v1618 = vld [vmem:[%s1616 + $0x8] sm:$0xff]
    %v1619 = vld [vmem:[%s1616 + $0x10] sm:$0xff]
    %v1620 = vpack.c.bf16 %v1611, %v1611
    %1621 = vmatprep.subr.bf16.mxu0 %v989
    %1622 = vmatpush1.bf16.msra.mxu0 %v988
    %1623 = vmatprep.subr.bf16.mxu0 %v992
    %1624 = vmatpush1.bf16.msra.mxu0 %v991
    %1625 = vmatprep.subr.bf16.mxu0 %v995
    %1626 = vmatpush1.bf16.msra.mxu0 %v994
    %1627 = vmatprep.subr.bf16.mxu0 %v998
    %1628 = vmatpush1.bf16.msra.mxu0 %v997
    %1629 = vmatprep.subr.bf16.mxu0 %v1001
    %1630 = vmatpush1.bf16.msra.mxu0 %v1000
    %1631 = vmatprep.subr.bf16.mxu0 %v1004
    %1632 = vmatpush1.bf16.msra.mxu0 %v1003
    %1633 = vmatprep.subr.bf16.mxu0 %v1007
    %1634 = vmatpush1.bf16.msra.mxu0 %v1006
    %1635 = vmatprep.subr.bf16.mxu0 %v1010
    %1636 = vmatpush1.bf16.msra.mxu0 %v1009
    %1637 = vmatprep.subr.bf16.mxu0 0
    %1638 = vmatpush1.bf16.msra.mxu0 0
    %1639 = vmatprep.subr.bf16.mxu0 0
    %1640 = vmatpush1.bf16.msra.mxu0 0
    %1641 = vmatprep.subr.bf16.mxu0 0
    %1642 = vmatpush1.bf16.msra.mxu0 0
    %1643 = vmatprep.subr.bf16.mxu0 0
    %1644 = vmatpush1.bf16.msra.mxu0 0
    %1645 = vmatprep.subr.bf16.mxu0 0
    %1646 = vmatpush1.bf16.msra.mxu0 0
    %1647 = vmatprep.subr.bf16.mxu0 0
    %1648 = vmatpush1.bf16.msra.mxu0 0
    %1649 = vmatprep.subr.bf16.mxu0 0
    %1650 = vmatpush1.bf16.msra.mxu0 0
    %1651 = vmatprep.subr.bf16.mxu0 0
    %1652 = vmatpush1.bf16.msra.mxu0 0
    %1653 = vmatprep.mubr.bf16.mxu0 0
    %1654 = vmatmul.mubr.bf16.gmra.mrb[0].mxu0 %v1620
    %v1655 = vpop.f32.mrb[0].mxu0
    %v1656 = vadd.f32 %v887, %v1655
    %v1657 = vpop.f32.mrb[0].mxu0
    %v1658 = vadd.f32 %v891, %v1657
    %v1659 = vpop.f32.mrb[0].mxu0
    %v1660 = vpop.f32.mrb[0].mxu0
    %1661 = vdwg.mxu0
    %1662 = vmatprep.subr.bf16.mxu0 0
    %1663 = vmatpush1.bf16.msra.mxu0 %v990
    %1664 = vmatprep.subr.bf16.mxu0 0
    %1665 = vmatpush1.bf16.msra.mxu0 %v993
    %1666 = vmatprep.subr.bf16.mxu0 0
    %1667 = vmatpush1.bf16.msra.mxu0 %v996
    %1668 = vmatprep.subr.bf16.mxu0 0
    %1669 = vmatpush1.bf16.msra.mxu0 %v999
    %1670 = vmatprep.subr.bf16.mxu0 0
    %1671 = vmatpush1.bf16.msra.mxu0 %v1002
    %1672 = vmatprep.subr.bf16.mxu0 0
    %1673 = vmatpush1.bf16.msra.mxu0 %v1005
    %1674 = vmatprep.subr.bf16.mxu0 0
    %1675 = vmatpush1.bf16.msra.mxu0 %v1008
    %1676 = vmatprep.subr.bf16.mxu0 0
    %1677 = vmatpush1.bf16.msra.mxu0 %v1011
    %1678 = vmatprep.subr.bf16.mxu0 0
    %1679 = vmatpush1.bf16.msra.mxu0 0
    %1680 = vmatprep.subr.bf16.mxu0 0
    %1681 = vmatpush1.bf16.msra.mxu0 0
    %1682 = vmatprep.subr.bf16.mxu0 0
    %1683 = vmatpush1.bf16.msra.mxu0 0
    %1684 = vmatprep.subr.bf16.mxu0 0
    %1685 = vmatpush1.bf16.msra.mxu0 0
    %1686 = vmatprep.subr.bf16.mxu0 0
    %1687 = vmatpush1.bf16.msra.mxu0 0
    %1688 = vmatprep.subr.bf16.mxu0 0
    %1689 = vmatpush1.bf16.msra.mxu0 0
    %1690 = vmatprep.subr.bf16.mxu0 0
    %1691 = vmatpush1.bf16.msra.mxu0 0
    %1692 = vmatprep.subr.bf16.mxu0 0
    %1693 = vmatpush1.bf16.msra.mxu0 0
    %1694 = vmatprep.mubr.bf16.mxu0 0
    %1695 = vmatmul.mubr.bf16.gmra.mrb[0].mxu0 %v1620
    %v1696 = vpop.f32.mrb[0].mxu0
    %v1697 = vadd.f32 %v895, %v1696
    %v1698 = vpop.f32.mrb[0].mxu0
    %v1699 = vpop.f32.mrb[0].mxu0
    %v1700 = vpop.f32.mrb[0].mxu0
    %1701 = vdwg.mxu0
    %v1702 = vadd.f32 %v1617, %v1656
    %v1703 = vxor.u32 %v1702, 2147483648
    %v1704 = vmul.f32 %v1703, 1.442695
    %v1705 = vpow.pop %v1704
    %v1706 = vadd.f32 %v1705, 1.0
    %v1707 = vrcp.pop %v1706
    %v1708 = vmul.f32 1.0, %v1707
    %v1709 = vadd.f32 %v1618, %v1658
    %v1710 = vxor.u32 %v1709, 2147483648
    %v1711 = vmul.f32 %v1710, 1.442695
    %v1712 = vpow.pop %v1711
    %v1713 = vadd.f32 %v1712, 1.0
    %v1714 = vrcp.pop %v1713
    %v1715 = vmul.f32 1.0, %v1714
    %v1716 = vmul.f32 %v1708, %v1697
    %v1717 = vadd.f32 %v1619, %v1716
    %v1718 = vtanh.pop %v1717
    %v1719 = vsub.f32 1.0, %v1715
    %v1720 = vmul.f32 %v1719, %v1718
    %v1721 = vmul.f32 %v1715, %v1611
    %v1722 = vadd.f32 %v1720, %v1721
    %s1723 = sadd.s32 %s1138, 5
    %p1724 = scmp.lt.s32.totalorder %s1723, 8
    %s1725 = scalar_select %p1724, 1, 0
    %v1726 = vstv %s1725
    %vm1727 = vcmp.eq.s32.totalorder %v1726, 1
    %v1728 = vsel %vm1727, %v1722, %v1611
    %v1729 = vsel %vm1727, %v1722, 0.0
    %v1730 = vadd.f32 %v1613, %v1729
    %s1731 = smul.u32 6, 3
    %s1732 = smul.addr %s1731, 8
    %s1733 = scalar_lea.vmem [#allocation4], %s1732
    %v1734 = vld [vmem:[%s1733] sm:$0xff]
    %v1735 = vld [vmem:[%s1733 + $0x8] sm:$0xff]
    %v1736 = vld [vmem:[%s1733 + $0x10] sm:$0xff]
    %v1737 = vpack.c.bf16 %v1728, %v1728
    %1738 = vmatprep.subr.bf16.mxu0 %v989
    %1739 = vmatpush1.bf16.msra.mxu0 %v988
    %1740 = vmatprep.subr.bf16.mxu0 %v992
    %1741 = vmatpush1.bf16.msra.mxu0 %v991
    %1742 = vmatprep.subr.bf16.mxu0 %v995
    %1743 = vmatpush1.bf16.msra.mxu0 %v994
    %1744 = vmatprep.subr.bf16.mxu0 %v998
    %1745 = vmatpush1.bf16.msra.mxu0 %v997
    %1746 = vmatprep.subr.bf16.mxu0 %v1001
    %1747 = vmatpush1.bf16.msra.mxu0 %v1000
    %1748 = vmatprep.subr.bf16.mxu0 %v1004
    %1749 = vmatpush1.bf16.msra.mxu0 %v1003
    %1750 = vmatprep.subr.bf16.mxu0 %v1007
    %1751 = vmatpush1.bf16.msra.mxu0 %v1006
    %1752 = vmatprep.subr.bf16.mxu0 %v1010
    %1753 = vmatpush1.bf16.msra.mxu0 %v1009
    %1754 = vmatprep.subr.bf16.mxu0 0
    %1755 = vmatpush1.bf16.msra.mxu0 0
    %1756 = vmatprep.subr.bf16.mxu0 0
    %1757 = vmatpush1.bf16.msra.mxu0 0
    %1758 = vmatprep.subr.bf16.mxu0 0
    %1759 = vmatpush1.bf16.msra.mxu0 0
    %1760 = vmatprep.subr.bf16.mxu0 0
    %1761 = vmatpush1.bf16.msra.mxu0 0
    %1762 = vmatprep.subr.bf16.mxu0 0
    %1763 = vmatpush1.bf16.msra.mxu0 0
    %1764 = vmatprep.subr.bf16.mxu0 0
    %1765 = vmatpush1.bf16.msra.mxu0 0
    %1766 = vmatprep.subr.bf16.mxu0 0
    %1767 = vmatpush1.bf16.msra.mxu0 0
    %1768 = vmatprep.subr.bf16.mxu0 0
    %1769 = vmatpush1.bf16.msra.mxu0 0
    %1770 = vmatprep.mubr.bf16.mxu0 0
    %1771 = vmatmul.mubr.bf16.gmra.mrb[0].mxu0 %v1737
    %v1772 = vpop.f32.mrb[0].mxu0
    %v1773 = vadd.f32 %v887, %v1772
    %v1774 = vpop.f32.mrb[0].mxu0
    %v1775 = vadd.f32 %v891, %v1774
    %v1776 = vpop.f32.mrb[0].mxu0
    %v1777 = vpop.f32.mrb[0].mxu0
    %1778 = vdwg.mxu0
    %1779 = vmatprep.subr.bf16.mxu0 0
    %1780 = vmatpush1.bf16.msra.mxu0 %v990
    %1781 = vmatprep.subr.bf16.mxu0 0
    %1782 = vmatpush1.bf16.msra.mxu0 %v993
    %1783 = vmatprep.subr.bf16.mxu0 0
    %1784 = vmatpush1.bf16.msra.mxu0 %v996
    %1785 = vmatprep.subr.bf16.mxu0 0
    %1786 = vmatpush1.bf16.msra.mxu0 %v999
    %1787 = vmatprep.subr.bf16.mxu0 0
    %1788 = vmatpush1.bf16.msra.mxu0 %v1002
    %1789 = vmatprep.subr.bf16.mxu0 0
    %1790 = vmatpush1.bf16.msra.mxu0 %v1005
    %1791 = vmatprep.subr.bf16.mxu0 0
    %1792 = vmatpush1.bf16.msra.mxu0 %v1008
    %1793 = vmatprep.subr.bf16.mxu0 0
    %1794 = vmatpush1.bf16.msra.mxu0 %v1011
    %1795 = vmatprep.subr.bf16.mxu0 0
    %1796 = vmatpush1.bf16.msra.mxu0 0
    %1797 = vmatprep.subr.bf16.mxu0 0
    %1798 = vmatpush1.bf16.msra.mxu0 0
    %1799 = vmatprep.subr.bf16.mxu0 0
    %1800 = vmatpush1.bf16.msra.mxu0 0
    %1801 = vmatprep.subr.bf16.mxu0 0
    %1802 = vmatpush1.bf16.msra.mxu0 0
    %1803 = vmatprep.subr.bf16.mxu0 0
    %1804 = vmatpush1.bf16.msra.mxu0 0
    %1805 = vmatprep.subr.bf16.mxu0 0
    %1806 = vmatpush1.bf16.msra.mxu0 0
    %1807 = vmatprep.subr.bf16.mxu0 0
    %1808 = vmatpush1.bf16.msra.mxu0 0
    %1809 = vmatprep.subr.bf16.mxu0 0
    %1810 = vmatpush1.bf16.msra.mxu0 0
    %1811 = vmatprep.mubr.bf16.mxu0 0
    %1812 = vmatmul.mubr.bf16.gmra.mrb[0].mxu0 %v1737
    %v1813 = vpop.f32.mrb[0].mxu0
    %v1814 = vadd.f32 %v895, %v1813
    %v1815 = vpop.f32.mrb[0].mxu0
    %v1816 = vpop.f32.mrb[0].mxu0
    %v1817 = vpop.f32.mrb[0].mxu0
    %1818 = vdwg.mxu0
    %v1819 = vadd.f32 %v1734, %v1773
    %v1820 = vxor.u32 %v1819, 2147483648
    %v1821 = vmul.f32 %v1820, 1.442695
    %v1822 = vpow.pop %v1821
    %v1823 = vadd.f32 %v1822, 1.0
    %v1824 = vrcp.pop %v1823
    %v1825 = vmul.f32 1.0, %v1824
    %v1826 = vadd.f32 %v1735, %v1775
    %v1827 = vxor.u32 %v1826, 2147483648
    %v1828 = vmul.f32 %v1827, 1.442695
    %v1829 = vpow.pop %v1828
    %v1830 = vadd.f32 %v1829, 1.0
    %v1831 = vrcp.pop %v1830
    %v1832 = vmul.f32 1.0, %v1831
    %v1833 = vmul.f32 %v1825, %v1814
    %v1834 = vadd.f32 %v1736, %v1833
    %v1835 = vtanh.pop %v1834
    %v1836 = vsub.f32 1.0, %v1832
    %v1837 = vmul.f32 %v1836, %v1835
    %v1838 = vmul.f32 %v1832, %v1728
    %v1839 = vadd.f32 %v1837, %v1838
    %s1840 = sadd.s32 %s1138, 6
    %p1841 = scmp.lt.s32.totalorder %s1840, 8
    %s1842 = scalar_select %p1841, 1, 0
    %v1843 = vstv %s1842
    %vm1844 = vcmp.eq.s32.totalorder %v1843, 1
    %v1845 = vsel %vm1844, %v1839, %v1728
    %v1846 = vsel %vm1844, %v1839, 0.0
    %v1847 = vadd.f32 %v1730, %v1846
    %s1848 = smul.u32 7, 3
    %s1849 = smul.addr %s1848, 8
    %s1850 = scalar_lea.vmem [#allocation4], %s1849
    %v1851 = vld [vmem:[%s1850] sm:$0xff]
    %v1852 = vld [vmem:[%s1850 + $0x8] sm:$0xff]
    %v1853 = vld [vmem:[%s1850 + $0x10] sm:$0xff]
    %v1854 = vpack.c.bf16 %v1845, %v1845
    %1855 = vmatprep.subr.bf16.mxu0 %v989
    %1856 = vmatpush1.bf16.msra.mxu0 %v988
    %1857 = vmatprep.subr.bf16.mxu0 %v992
    %1858 = vmatpush1.bf16.msra.mxu0 %v991
    %1859 = vmatprep.subr.bf16.mxu0 %v995
    %1860 = vmatpush1.bf16.msra.mxu0 %v994
    %1861 = vmatprep.subr.bf16.mxu0 %v998
    %1862 = vmatpush1.bf16.msra.mxu0 %v997
    %1863 = vmatprep.subr.bf16.mxu0 %v1001
    %1864 = vmatpush1.bf16.msra.mxu0 %v1000
    %1865 = vmatprep.subr.bf16.mxu0 %v1004
    %1866 = vmatpush1.bf16.msra.mxu0 %v1003
    %1867 = vmatprep.subr.bf16.mxu0 %v1007
    %1868 = vmatpush1.bf16.msra.mxu0 %v1006
    %1869 = vmatprep.subr.bf16.mxu0 %v1010
    %1870 = vmatpush1.bf16.msra.mxu0 %v1009
    %1871 = vmatprep.subr.bf16.mxu0 0
    %1872 = vmatpush1.bf16.msra.mxu0 0
    %1873 = vmatprep.subr.bf16.mxu0 0
    %1874 = vmatpush1.bf16.msra.mxu0 0
    %1875 = vmatprep.subr.bf16.mxu0 0
    %1876 = vmatpush1.bf16.msra.mxu0 0
    %1877 = vmatprep.subr.bf16.mxu0 0
    %1878 = vmatpush1.bf16.msra.mxu0 0
    %1879 = vmatprep.subr.bf16.mxu0 0
    %1880 = vmatpush1.bf16.msra.mxu0 0
    %1881 = vmatprep.subr.bf16.mxu0 0
    %1882 = vmatpush1.bf16.msra.mxu0 0
    %1883 = vmatprep.subr.bf16.mxu0 0
    %1884 = vmatpush1.bf16.msra.mxu0 0
    %1885 = vmatprep.subr.bf16.mxu0 0
    %1886 = vmatpush1.bf16.msra.mxu0 0
    %1887 = vmatprep.mubr.bf16.mxu0 0
    %1888 = vmatmul.mubr.bf16.gmra.mrb[0].mxu0 %v1854
    %v1889 = vpop.f32.mrb[0].mxu0
    %v1890 = vadd.f32 %v887, %v1889
    %v1891 = vpop.f32.mrb[0].mxu0
    %v1892 = vadd.f32 %v891, %v1891
    %v1893 = vpop.f32.mrb[0].mxu0
    %v1894 = vpop.f32.mrb[0].mxu0
    %1895 = vdwg.mxu0
    %1896 = vmatprep.subr.bf16.mxu0 0
    %1897 = vmatpush1.bf16.msra.mxu0 %v990
    %1898 = vmatprep.subr.bf16.mxu0 0
    %1899 = vmatpush1.bf16.msra.mxu0 %v993
    %1900 = vmatprep.subr.bf16.mxu0 0
    %1901 = vmatpush1.bf16.msra.mxu0 %v996
    %1902 = vmatprep.subr.bf16.mxu0 0
    %1903 = vmatpush1.bf16.msra.mxu0 %v999
    %1904 = vmatprep.subr.bf16.mxu0 0
    %1905 = vmatpush1.bf16.msra.mxu0 %v1002
    %1906 = vmatprep.subr.bf16.mxu0 0
    %1907 = vmatpush1.bf16.msra.mxu0 %v1005
    %1908 = vmatprep.subr.bf16.mxu0 0
    %1909 = vmatpush1.bf16.msra.mxu0 %v1008
    %1910 = vmatprep.subr.bf16.mxu0 0
    %1911 = vmatpush1.bf16.msra.mxu0 %v1011
    %1912 = vmatprep.subr.bf16.mxu0 0
    %1913 = vmatpush1.bf16.msra.mxu0 0
    %1914 = vmatprep.subr.bf16.mxu0 0
    %1915 = vmatpush1.bf16.msra.mxu0 0
    %1916 = vmatprep.subr.bf16.mxu0 0
    %1917 = vmatpush1.bf16.msra.mxu0 0
    %1918 = vmatprep.subr.bf16.mxu0 0
    %1919 = vmatpush1.bf16.msra.mxu0 0
    %1920 = vmatprep.subr.bf16.mxu0 0
    %1921 = vmatpush1.bf16.msra.mxu0 0
    %1922 = vmatprep.subr.bf16.mxu0 0
    %1923 = vmatpush1.bf16.msra.mxu0 0
    %1924 = vmatprep.subr.bf16.mxu0 0
    %1925 = vmatpush1.bf16.msra.mxu0 0
    %1926 = vmatprep.subr.bf16.mxu0 0
    %1927 = vmatpush1.bf16.msra.mxu0 0
    %1928 = vmatprep.mubr.bf16.mxu0 0
    %1929 = vmatmul.mubr.bf16.gmra.mrb[0].mxu0 %v1854
    %v1930 = vpop.f32.mrb[0].mxu0
    %v1931 = vadd.f32 %v895, %v1930
    %v1932 = vpop.f32.mrb[0].mxu0
    %v1933 = vpop.f32.mrb[0].mxu0
    %v1934 = vpop.f32.mrb[0].mxu0
    %1935 = vdwg.mxu0
    %v1936 = vadd.f32 %v1851, %v1890
    %v1937 = vxor.u32 %v1936, 2147483648
    %v1938 = vmul.f32 %v1937, 1.442695
    %v1939 = vpow.pop %v1938
    %v1940 = vadd.f32 %v1939, 1.0
    %v1941 = vrcp.pop %v1940
    %v1942 = vmul.f32 1.0, %v1941
    %v1943 = vadd.f32 %v1852, %v1892
    %v1944 = vxor.u32 %v1943, 2147483648
    %v1945 = vmul.f32 %v1944, 1.442695
    %v1946 = vpow.pop %v1945
    %v1947 = vadd.f32 %v1946, 1.0
    %v1948 = vrcp.pop %v1947
    %v1949 = vmul.f32 1.0, %v1948
    %v1950 = vmul.f32 %v1942, %v1931
    %v1951 = vadd.f32 %v1853, %v1950
    %v1952 = vtanh.pop %v1951
    %v1953 = vsub.f32 1.0, %v1949
    %v1954 = vmul.f32 %v1953, %v1952
    %v1955 = vmul.f32 %v1949, %v1845
    %v1956 = vadd.f32 %v1954, %v1955
    %s1957 = sadd.s32 %s1138, 7
    %p1958 = scmp.lt.s32.totalorder %s1957, 8
    %s1959 = scalar_select %p1958, 1, 0
    %v1960 = vstv %s1959
    %vm1961 = vcmp.eq.s32.totalorder %v1960, 1
    %v1962 = vsel %vm1961, %v1956, %v1845
    %v1963 = vsel %vm1961, %v1956, 0.0
    %v1964 = vadd.f32 %v1847, %v1963
    %1965 = vst [vmem:[#allocation2] sm:$0xff] %v1962
    %1966 = vst [vmem:[#allocation3] sm:$0xff] %v1964
    // Predicated region
    $region66: #{tpu_custom_call.1} parent=1 // pred_check
      %p1967 = pneg %p95
    $region67: #{tpu_custom_call.1} parent=1 // pred_check_branch
      %1969 = sbr.rel (%p1967) target = $region69
    $region68: #{tpu_custom_call.1} parent=1 // pred_region
      %v1970 = vld [vmem:[#allocation3] sm:$0xff]
      %v1971 = vmul.f32 %v1970, 0.125
      %v1972 = vpack.c.bf16 %v1971, %v1971
      %v1973 = vld [vmem:[%s9] sm:$0xf]
      %v1974 = vld [vmem:[%s9 + $0x4] sm:$0xf]
      %v1975 = vld [vmem:[%s9 + $0x8] sm:$0xf]
      %v1976 = vld [vmem:[%s9 + $0xc] sm:$0xf]
      %v1977 = vld [vmem:[%s9 + $0x10] sm:$0xf]
      %v1978 = vld [vmem:[%s9 + $0x14] sm:$0xf]
      %v1979 = vld [vmem:[%s9 + $0x18] sm:$0xf]
      %v1980 = vld [vmem:[%s9 + $0x1c] sm:$0xf]
      %v1981 = vld [vmem:[%s9 + $0x20] sm:$0xf]
      %v1982 = vld [vmem:[%s9 + $0x24] sm:$0xf]
      %v1983 = vld [vmem:[%s9 + $0x28] sm:$0xf]
      %v1984 = vld [vmem:[%s9 + $0x2c] sm:$0xf]
      %v1985 = vld [vmem:[%s9 + $0x30] sm:$0xf]
      %v1986 = vld [vmem:[%s9 + $0x34] sm:$0xf]
      %v1987 = vld [vmem:[%s9 + $0x38] sm:$0xf]
      %v1988 = vld [vmem:[%s9 + $0x3c] sm:$0xf]
      %v1989 = vld [vmem:[%s10] sm:$0x1]
      %v1991 = vlaneseq
      %v1992 = vshrl.u32 %v1991, 7
      %v1993 = vsub.s32 0, %v1992
      %v1994 = vrot.slane %v1989, %v1993
      %v2012 = vunpack.c.l.b16 %v1973
      %v2013 = vunpack.c.l.b16 %v1974
      %v2014 = vunpack.c.l.b16 %v1975
      %v2015 = vunpack.c.l.b16 %v1976
      %v2016 = vunpack.c.l.b16 %v1977
      %v2017 = vunpack.c.l.b16 %v1978
      %v2018 = vunpack.c.l.b16 %v1979
      %v2019 = vunpack.c.l.b16 %v1980
      %v2020 = vunpack.c.l.b16 %v1981
      %v2021 = vunpack.c.l.b16 %v1982
      %v2022 = vunpack.c.l.b16 %v1983
      %v2023 = vunpack.c.l.b16 %v1984
      %v2024 = vunpack.c.l.b16 %v1985
      %v2025 = vunpack.c.l.b16 %v1986
      %v2026 = vunpack.c.l.b16 %v1987
      %v2027 = vunpack.c.l.b16 %v1988
      %v2028 = vpack.c.b16 %v2013, %v2012
      %v2029 = vpack.c.b16 %v2015, %v2014
      %v2030 = vpack.c.b16 %v2017, %v2016
      %v2031 = vpack.c.b16 %v2019, %v2018
      %v2032 = vpack.c.b16 %v2021, %v2020
      %v2033 = vpack.c.b16 %v2023, %v2022
      %v2034 = vpack.c.b16 %v2025, %v2024
      %v2035 = vpack.c.b16 %v2027, %v2026
      %2044 = vmatprep.subr.bf16.mxu0 0
      %2045 = vmatpush1.bf16.msra.mxu0 %v2028
      %2046 = vmatprep.subr.bf16.mxu0 0
      %2047 = vmatpush1.bf16.msra.mxu0 %v2029
      %2048 = vmatprep.subr.bf16.mxu0 0
      %2049 = vmatpush1.bf16.msra.mxu0 %v2030
      %2050 = vmatprep.subr.bf16.mxu0 0
      %2051 = vmatpush1.bf16.msra.mxu0 %v2031
      %2052 = vmatprep.subr.bf16.mxu0 0
      %2053 = vmatpush1.bf16.msra.mxu0 %v2032
      %2054 = vmatprep.subr.bf16.mxu0 0
      %2055 = vmatpush1.bf16.msra.mxu0 %v2033
      %2056 = vmatprep.subr.bf16.mxu0 0
      %2057 = vmatpush1.bf16.msra.mxu0 %v2034
      %2058 = vmatprep.subr.bf16.mxu0 0
      %2059 = vmatpush1.bf16.msra.mxu0 %v2035
      %2060 = vmatprep.subr.bf16.mxu0 0
      %2061 = vmatpush1.bf16.msra.mxu0 0
      %2062 = vmatprep.subr.bf16.mxu0 0
      %2063 = vmatpush1.bf16.msra.mxu0 0
      %2064 = vmatprep.subr.bf16.mxu0 0
      %2065 = vmatpush1.bf16.msra.mxu0 0
      %2066 = vmatprep.subr.bf16.mxu0 0
      %2067 = vmatpush1.bf16.msra.mxu0 0
      %2068 = vmatprep.subr.bf16.mxu0 0
      %2069 = vmatpush1.bf16.msra.mxu0 0
      %2070 = vmatprep.subr.bf16.mxu0 0
      %2071 = vmatpush1.bf16.msra.mxu0 0
      %2072 = vmatprep.subr.bf16.mxu0 0
      %2073 = vmatpush1.bf16.msra.mxu0 0
      %2074 = vmatprep.subr.bf16.mxu0 0
      %2075 = vmatpush1.bf16.msra.mxu0 0
      %2076 = vmatprep.mubr.bf16.mxu0 0
      %2077 = vmatmul.mubr.bf16.gmra.mrb[0].mxu0 %v1972
      %v2078 = vpop.f32.mrb[0].mxu0
      %v2079 = vadd.f32 %v1994, %v2078
      %v2080 = vpop.f32.mrb[0].mxu0
      %v2081 = vpop.f32.mrb[0].mxu0
      %v2082 = vpop.f32.mrb[0].mxu0
      %2083 = vdwg.mxu0
      %2084 = vst [vmem:[#allocation13] sm:$0xff] %v2079
    $region69: #{tpu_custom_call.1} parent=1 // pred_fallthru
      _
    // Predicated region
    $region70: #{tpu_custom_call.1} parent=1 // pred_check
      _
    $region71: #{tpu_custom_call.1} parent=1 // pred_check_branch
      %2086 = sbr.rel (0) target = $region73
    $region72: #{tpu_custom_call.1} parent=1 // pred_region
      %s2088 = ssub.s32 128, 128
      %2089 = vsyncadd [#allocation7], %s2088
      %s2091 = sshll.u32 [#allocation13], 4
      %s2092 = int_to_ptr.vmem [resolvable:$true] %s2091
      %2094 = dma.vmem_to_hbm [thread:$0]  %s2092, 128, %s11, [#allocation7]
    $region73: #{tpu_custom_call.1} parent=1 // pred_fallthru
      _
    // Predicated region
    $region74: #{tpu_custom_call.1} parent=1 // pred_check
      _
    $region75: #{tpu_custom_call.1} parent=1 // pred_check_branch
      %2096 = sbr.rel (0) target = $region77
    $region76: #{tpu_custom_call.1} parent=1 // pred_region
      %2097 = dma.done [#allocation7], 128
    $region77: #{tpu_custom_call.1} parent=1 // pred_fallthru
      _
    %2098 = vsyncpa [#allocation6], 1
    %2099 = vsyncpa [#allocation9], 1
    %2100 = vsyncpa [#allocation12], 1
    %2101 = vsyncpa [#allocation7], 1

</llo_original>
